<compile_context>
chip_gen: v7x
topology: tpu7x:2x2x1
jax: 0.10.0
libtpu: 0.0.40
codegen_flags: <defaults>
</compile_context>

<pallas_src>
import functools
import math

import jax
import jax.numpy as jnp
from jax.experimental import pallas as pl
from jax.experimental.pallas import tpu as pltpu


# ----------------------------------------------------------------------------
# Pallas kernel: full LSTM stack + final linear head in a single program.
# ----------------------------------------------------------------------------
def _lstm_fc_kernel(num_layers, hidden_size, seq_len, batch_blk, time_chunk,
                    x_ref, *refs):
    # refs = (w_ih_T, w_hh_T, b) * num_layers, fc_w, fc_b, out_ref, seq_scratch
    n_w = 3 * num_layers
    layer_refs = refs[:n_w]
    fc_w_ref = refs[n_w]
    fc_b_ref = refs[n_w + 1]
    out_ref = refs[n_w + 2]
    seq_ref = refs[n_w + 3]            # (T*Bb, H) bf16: non-top layer outputs

    H = hidden_size
    T = seq_len
    Bb = batch_blk
    Tc = time_chunk

    def load_in_chunk(layer, row_lo, row_hi):
        # Static slices -> zero-cost views; only the chunk is live.
        if layer == 0:
            return x_ref[0, row_lo:row_hi, :]          # (rows, F_in) bf16
        return seq_ref[row_lo:row_hi, :]               # (rows, H)   bf16

    h = None
    for l in range(num_layers):
        w_ih_T = layer_refs[3 * l][...]        # (F_in, 4H) bf16, cols (i,f,o,g)
        w_hh_T = layer_refs[3 * l + 1][...]    # (H,   4H) bf16, cols (i,f,o,g)
        b = layer_refs[3 * l + 2][...]         # (1,   4H) f32  (b_ih + b_hh)
        last_layer = (l == num_layers - 1)

        c = None
        for t0 in range(0, T, Tc):
            tc = min(Tc, T - t0)
            # Hoisted input projection for this time chunk: independent of
            # (h, c) -> off the serial recurrence critical path, one matmul
            # amortized over Tc steps, live value bounded to (Tc*Bb, 4H) f32.
            gx = jnp.dot(load_in_chunk(l, t0 * Bb, (t0 + tc) * Bb), w_ih_T,
                         preferred_element_type=jnp.float32) + b

            # Fully unrolled recurrence within the chunk (T static & small).
            for tt in range(tc):
                t = t0 + tt
                gx_t = gx[tt * Bb:(tt + 1) * Bb, :]          # (Bb, 4H), static
                if t == 0:
                    gates = gx_t                              # h_0 == 0
                else:
                    gates = gx_t + jnp.dot(
                        h, w_hh_T, preferred_element_type=jnp.float32)
                # Gate order (i, f, o, g): one sigmoid over the contiguous
                # first 3H lanes, one tanh over the last H lanes.
                sig = jax.nn.sigmoid(gates[:, 0:3 * H])
                g_g = jnp.tanh(gates[:, 3 * H:4 * H])
                i_g = sig[:, 0:H]
                f_g = sig[:, H:2 * H]
                o_g = sig[:, 2 * H:3 * H]
                c = i_g * g_g if t == 0 else f_g * c + i_g * g_g   # c_0 == 0
                # h is consumed only as a bf16 MXU operand / bf16 seq store,
                # so cast once here; cell math above stays f32.
                h = (o_g * jnp.tanh(c)).astype(jnp.bfloat16)
                if not last_layer:
                    # Record this layer's output sequence (bf16) for the next
                    # layer's hoisted projection.  Skipped for the top layer.
                    seq_ref[t * Bb:(t + 1) * Bb, :] = h

    # fc1 on output[:, -1, :]  (== top layer's last hidden state).
    out_ref[...] = (
        jnp.dot(h, fc_w_ref[...], preferred_element_type=jnp.float32)
        + fc_b_ref[...]
    )


def _ifgo_to_ifog(arr):
    """Repack gate columns from PyTorch order (i,f,g,o) to (i,f,o,g)."""
    i, f, g, o = jnp.split(arr, 4, axis=-1)
    return jnp.concatenate([i, f, o, g], axis=-1)


def _replicated_spec(shape):
    zeros = (0,) * len(shape)
    return pl.BlockSpec(shape, lambda b, _z=zeros: _z)


def my_module_forward(x, params, *, hidden_size, num_layers,
                      num_batch_blocks=1, time_chunk=None):
    """x: (B, T, num_inputs) float32, batch_first (PyTorch convention).

    num_batch_blocks: shards the (padded) batch over a "parallel" grid axis —
    only worth >1 on v7x and only when each block keeps Bb >= 8; on single-TC
    v5e/v6e extra grid blocks are purely sequential overhead.
    """
    B, T, F = x.shape
    H = hidden_size

    # Pad batch so each block is a multiple of 8 sublanes: full (unmasked)
    # per-step stores and no wasted vreg sublanes.  Padded rows sliced off.
    pad_to = 8 * num_batch_blocks
    B_pad = ((B + pad_to - 1) // pad_to) * pad_to
    if B_pad != B:
        x = jnp.concatenate(
            [x, jnp.zeros((B_pad - B, T, F), x.dtype)], axis=0)
    Bb = B_pad // num_batch_blocks
    assert Bb % 8 == 0

    if time_chunk is None:
        # Bound the live f32 gates_x chunk to ~2 MiB of VMEM.
        max_rows = max(Bb, (2 * 1024 * 1024) // (4 * H * 4))
        time_chunk = max(1, min(T, max_rows // Bb))

    # (B_pad, T, F) -> (nbb, T*Bb, F): time-major inside each batch block
    # (row = t*Bb + j), pre-cast to bf16 (MXU operand).  Plain XLA ops.
    x_blk = jnp.transpose(x, (1, 0, 2)).reshape(T, num_batch_blocks, Bb, F)
    x_blk = jnp.transpose(x_blk, (1, 0, 2, 3)).reshape(
        num_batch_blocks, T * Bb, F).astype(jnp.bfloat16)

    inputs = [x_blk]
    in_specs = [pl.BlockSpec((1, T * Bb, F), lambda b: (b, 0, 0))]
    for (w_ih_T, w_hh_T, bias) in params["layers"]:
        for arr in (_ifgo_to_ifog(w_ih_T).astype(jnp.bfloat16),
                    _ifgo_to_ifog(w_hh_T).astype(jnp.bfloat16),
                    _ifgo_to_ifog(bias)):
            inputs.append(arr)
            in_specs.append(_replicated_spec(arr.shape))
    fc_w = params["fc_w"].astype(jnp.bfloat16)
    fc_b = params["fc_b"]
    num_outputs = fc_w.shape[1]
    inputs += [fc_w, fc_b]
    in_specs += [_replicated_spec(fc_w.shape), _replicated_spec(fc_b.shape)]

    kernel = functools.partial(_lstm_fc_kernel, num_layers, H, T, Bb,
                               time_chunk)
    out = pl.pallas_call(
        kernel,
        grid=(num_batch_blocks,),
        out_shape=jax.ShapeDtypeStruct((B_pad, num_outputs), jnp.float32),
        in_specs=in_specs,
        out_specs=pl.BlockSpec((Bb, num_outputs), lambda b: (b, 0)),
        scratch_shapes=[pltpu.VMEM((T * Bb, H), jnp.bfloat16)],
        compiler_params=pltpu.CompilerParams(
            dimension_semantics=("parallel",),
            # Explicit scoped-VMEM limit with headroom under v7x's 64 MiB.
            vmem_limit_bytes=32 * 1024 * 1024),
    )(*inputs)
    return out[:B]


# ----------------------------------------------------------------------------
# Deterministic parameter init (PyTorch-style U(-1/sqrt(H), 1/sqrt(H)), f32)
# Weights kept in PyTorch gate order (i, f, g, o); the wrapper repacks them.
# ----------------------------------------------------------------------------
def init_params(key, num_inputs, num_outputs, hidden_size, num_layers):
    stdv = 1.0 / math.sqrt(hidden_size)
    layers = []
    for l in range(num_layers):
        in_f = num_inputs if l == 0 else hidden_size
        key, k1, k2, k3, k4 = jax.random.split(key, 5)
        w_ih = jax.random.uniform(k1, (4 * hidden_size, in_f), jnp.float32, -stdv, stdv)
        w_hh = jax.random.uniform(k2, (4 * hidden_size, hidden_size), jnp.float32, -stdv, stdv)
        b_ih = jax.random.uniform(k3, (4 * hidden_size,), jnp.float32, -stdv, stdv)
        b_hh = jax.random.uniform(k4, (4 * hidden_size,), jnp.float32, -stdv, stdv)
        # Pre-transpose weights and combine biases for the kernel.
        layers.append((w_ih.T, w_hh.T, (b_ih + b_hh)[None, :]))
    key, k5, k6 = jax.random.split(key, 3)
    fc_w = jax.random.uniform(k5, (num_outputs, hidden_size), jnp.float32, -stdv, stdv)
    fc_b = jax.random.uniform(k6, (num_outputs,), jnp.float32, -stdv, stdv)
    return {"layers": layers, "fc_w": fc_w.T, "fc_b": fc_b[None, :]}


# ----------------------------------------------------------------------------
# Pure-JAX f32 reference (mirrors torch.nn.LSTM + fc1) for correctness check.
# ----------------------------------------------------------------------------
def reference_forward(x, params, *, hidden_size, num_layers):
    B, T, _ = x.shape
    H = hidden_size
    seq = x
    for l in range(num_layers):
        w_ih_T, w_hh_T, b = params["layers"][l]
        h = jnp.zeros((B, H), jnp.float32)
        c = jnp.zeros((B, H), jnp.float32)
        outs = []
        for t in range(T):
            gates = seq[:, t, :] @ w_ih_T + h @ w_hh_T + b
            i_g = jax.nn.sigmoid(gates[:, 0:H])
            f_g = jax.nn.sigmoid(gates[:, H:2 * H])
            g_g = jnp.tanh(gates[:, 2 * H:3 * H])
            o_g = jax.nn.sigmoid(gates[:, 3 * H:4 * H])
            c = f_g * c + i_g * g_g
            h = o_g * jnp.tanh(c)
            outs.append(h)
        seq = jnp.stack(outs, axis=1)
    return seq[:, -1, :] @ params["fc_w"] + params["fc_b"]


if __name__ == "__main__":
    # Small shapes consistent with MyModule(num_inputs, num_outputs, hidden, layers)
    batch, seq_len = 2, 8
    num_inputs, num_outputs, hidden_size, num_layers = 4, 3, 32, 2

    key = jax.random.PRNGKey(0)
    key, xk = jax.random.split(key)
    x = jax.random.normal(xk, (batch, seq_len, num_inputs), jnp.float32)

    params = init_params(key, num_inputs, num_outputs, hidden_size, num_layers)

    pred = my_module_forward(x, params, hidden_size=hidden_size, num_layers=num_layers)
    pred = jax.block_until_ready(pred)

    ref = reference_forward(x, params, hidden_size=hidden_size, num_layers=num_layers)
    assert pred.shape == (batch, num_outputs)
    # bf16 MXU operands accumulate rounding through the T-step recurrence;
    # tolerance documented (strict PyTorch parity would need f32 matmuls).
    assert jnp.allclose(pred, ref, atol=1e-2, rtol=1e-2), (
        f"max abs diff {jnp.max(jnp.abs(pred - ref))}"
    )

    print("KERNEL_OK")
</pallas_src>

<mosaic_0001>
module attributes {stable_mosaic.version = 11 : i64} {
  func.func @_lstm_fc_kernel(%arg0: i32, %arg1: memref<1x64x4xbf16, #tpu.memory_space<vmem>>, %arg2: memref<4x128xbf16, #tpu.memory_space<vmem>>, %arg3: memref<32x128xbf16, #tpu.memory_space<vmem>>, %arg4: memref<1x128xf32, #tpu.memory_space<vmem>>, %arg5: memref<32x128xbf16, #tpu.memory_space<vmem>>, %arg6: memref<32x128xbf16, #tpu.memory_space<vmem>>, %arg7: memref<1x128xf32, #tpu.memory_space<vmem>>, %arg8: memref<32x3xbf16, #tpu.memory_space<vmem>>, %arg9: memref<1x3xf32, #tpu.memory_space<vmem>>, %arg10: memref<8x3xf32, #tpu.memory_space<vmem>>, %arg11: memref<64x32xbf16, #tpu.memory_space<vmem>>) attributes {dimension_semantics = [#tpu.dimension_semantics<parallel>], iteration_bounds = array<i64: 1>, scalar_prefetch = 0 : i64, scratch_operands = 1 : i64, tpu.core_type = #tpu.core_type<tc>, window_params = [{transform_indices = @transform_0, window_bounds = array<i64: 1, 64, 4>}, {pipeline_mode = #tpu.pipeline_mode<synchronous>, transform_indices = @transform_1, window_bounds = array<i64: 4, 128>}, {pipeline_mode = #tpu.pipeline_mode<synchronous>, transform_indices = @transform_2, window_bounds = array<i64: 32, 128>}, {pipeline_mode = #tpu.pipeline_mode<synchronous>, transform_indices = @transform_3, window_bounds = array<i64: 1, 128>}, {pipeline_mode = #tpu.pipeline_mode<synchronous>, transform_indices = @transform_4, window_bounds = array<i64: 32, 128>}, {pipeline_mode = #tpu.pipeline_mode<synchronous>, transform_indices = @transform_5, window_bounds = array<i64: 32, 128>}, {pipeline_mode = #tpu.pipeline_mode<synchronous>, transform_indices = @transform_6, window_bounds = array<i64: 1, 128>}, {pipeline_mode = #tpu.pipeline_mode<synchronous>, transform_indices = @transform_7, window_bounds = array<i64: 32, 3>}, {pipeline_mode = #tpu.pipeline_mode<synchronous>, transform_indices = @transform_8, window_bounds = array<i64: 1, 3>}, {transform_indices = @transform_9, window_bounds = array<i64: 8, 3>}]} {
    %c0 = arith.constant 0 : index
    %c0_0 = arith.constant 0 : index
    %0 = vector.load %arg2[%c0, %c0_0] : memref<4x128xbf16, #tpu.memory_space<vmem>>, vector<4x128xbf16>
    %c0_1 = arith.constant 0 : index
    %c0_2 = arith.constant 0 : index
    %1 = vector.load %arg3[%c0_1, %c0_2] : memref<32x128xbf16, #tpu.memory_space<vmem>>, vector<32x128xbf16>
    %c0_3 = arith.constant 0 : index
    %c0_4 = arith.constant 0 : index
    %2 = vector.load %arg4[%c0_3, %c0_4] : memref<1x128xf32, #tpu.memory_space<vmem>>, vector<1x128xf32>
    %c0_5 = arith.constant 0 : index
    %c0_6 = arith.constant 0 : index
    %c0_7 = arith.constant 0 : index
    %3 = vector.load %arg1[%c0_5, %c0_6, %c0_7] : memref<1x64x4xbf16, #tpu.memory_space<vmem>>, vector<1x64x4xbf16>
    %4 = vector.shape_cast %3 : vector<1x64x4xbf16> to vector<64x4xbf16>
    %cst = arith.constant dense<0.000000e+00> : vector<64x128xf32>
    %5 = tpu.matmul %4, %0, %cst {dimension_numbers = #tpu.dot_dimension_numbers<[1], [0], [0], [1], [0, 0, 1, 1], [], []>} : vector<64x4xbf16>, vector<4x128xbf16>, vector<64x128xf32> -> vector<64x128xf32>
    %6 = vector.broadcast %2 : vector<1x128xf32> to vector<64x128xf32>
    %7 = arith.addf %5, %6 : vector<64x128xf32>
    %8 = vector.extract_strided_slice %7 {offsets = [0, 0], sizes = [8, 128], strides = [1, 1]} : vector<64x128xf32> to vector<8x128xf32>
    %9 = vector.extract_strided_slice %8 {offsets = [0, 0], sizes = [8, 96], strides = [1, 1]} : vector<8x128xf32> to vector<8x96xf32>
    %10 = arith.negf %9 : vector<8x96xf32>
    %11 = math.exp %10 : vector<8x96xf32>
    %cst_8 = arith.constant 1.000000e+00 : f32
    %12 = vector.broadcast %cst_8 : f32 to vector<8x96xf32>
    %13 = arith.addf %12, %11 : vector<8x96xf32>
    %14 = arith.divf %12, %13 : vector<8x96xf32>
    %15 = vector.extract_strided_slice %8 {offsets = [0, 96], sizes = [8, 32], strides = [1, 1]} : vector<8x128xf32> to vector<8x32xf32>
    %16 = math.tanh %15 : vector<8x32xf32>
    %17 = vector.extract_strided_slice %14 {offsets = [0, 0], sizes = [8, 32], strides = [1, 1]} : vector<8x96xf32> to vector<8x32xf32>
    %18 = vector.extract_strided_slice %14 {offsets = [0, 64], sizes = [8, 32], strides = [1, 1]} : vector<8x96xf32> to vector<8x32xf32>
    %19 = arith.mulf %17, %16 : vector<8x32xf32>
    %20 = math.tanh %19 : vector<8x32xf32>
    %21 = arith.mulf %18, %20 : vector<8x32xf32>
    %22 = arith.truncf %21 : vector<8x32xf32> to vector<8x32xbf16>
    %c0_9 = arith.constant 0 : index
    %c0_10 = arith.constant 0 : index
    %23 = vector.load %arg11[%c0_9, %c0_10] : memref<64x32xbf16, #tpu.memory_space<vmem>>, vector<8x32xbf16>
    tpu.vector_store %arg11[%c0_9, %c0_10], %22 {strides = array<i32>} : memref<64x32xbf16, #tpu.memory_space<vmem>>, vector<8x32xbf16>,
    %24 = vector.extract_strided_slice %7 {offsets = [8, 0], sizes = [8, 128], strides = [1, 1]} : vector<64x128xf32> to vector<8x128xf32>
    %cst_11 = arith.constant dense<0.000000e+00> : vector<8x128xf32>
    %25 = tpu.matmul %22, %1, %cst_11 {dimension_numbers = #tpu.dot_dimension_numbers<[1], [0], [0], [1], [0, 0, 1, 1], [], []>} : vector<8x32xbf16>, vector<32x128xbf16>, vector<8x128xf32> -> vector<8x128xf32>
    %26 = arith.addf %24, %25 : vector<8x128xf32>
    %27 = vector.extract_strided_slice %26 {offsets = [0, 0], sizes = [8, 96], strides = [1, 1]} : vector<8x128xf32> to vector<8x96xf32>
    %28 = arith.negf %27 : vector<8x96xf32>
    %29 = math.exp %28 : vector<8x96xf32>
    %cst_12 = arith.constant 1.000000e+00 : f32
    %30 = vector.broadcast %cst_12 : f32 to vector<8x96xf32>
    %31 = arith.addf %30, %29 : vector<8x96xf32>
    %32 = arith.divf %30, %31 : vector<8x96xf32>
    %33 = vector.extract_strided_slice %26 {offsets = [0, 96], sizes = [8, 32], strides = [1, 1]} : vector<8x128xf32> to vector<8x32xf32>
    %34 = math.tanh %33 : vector<8x32xf32>
    %35 = vector.extract_strided_slice %32 {offsets = [0, 0], sizes = [8, 32], strides = [1, 1]} : vector<8x96xf32> to vector<8x32xf32>
    %36 = vector.extract_strided_slice %32 {offsets = [0, 32], sizes = [8, 32], strides = [1, 1]} : vector<8x96xf32> to vector<8x32xf32>
    %37 = vector.extract_strided_slice %32 {offsets = [0, 64], sizes = [8, 32], strides = [1, 1]} : vector<8x96xf32> to vector<8x32xf32>
    %38 = arith.mulf %36, %19 : vector<8x32xf32>
    %39 = arith.mulf %35, %34 : vector<8x32xf32>
    %40 = arith.addf %38, %39 : vector<8x32xf32>
    %41 = math.tanh %40 : vector<8x32xf32>
    %42 = arith.mulf %37, %41 : vector<8x32xf32>
    %43 = arith.truncf %42 : vector<8x32xf32> to vector<8x32xbf16>
    %c8 = arith.constant 8 : index
    %c0_13 = arith.constant 0 : index
    %44 = vector.load %arg11[%c8, %c0_13] : memref<64x32xbf16, #tpu.memory_space<vmem>>, vector<8x32xbf16>
    tpu.vector_store %arg11[%c8, %c0_13], %43 {strides = array<i32>} : memref<64x32xbf16, #tpu.memory_space<vmem>>, vector<8x32xbf16>,
    %45 = vector.extract_strided_slice %7 {offsets = [16, 0], sizes = [8, 128], strides = [1, 1]} : vector<64x128xf32> to vector<8x128xf32>
    %cst_14 = arith.constant dense<0.000000e+00> : vector<8x128xf32>
    %46 = tpu.matmul %43, %1, %cst_14 {dimension_numbers = #tpu.dot_dimension_numbers<[1], [0], [0], [1], [0, 0, 1, 1], [], []>} : vector<8x32xbf16>, vector<32x128xbf16>, vector<8x128xf32> -> vector<8x128xf32>
    %47 = arith.addf %45, %46 : vector<8x128xf32>
    %48 = vector.extract_strided_slice %47 {offsets = [0, 0], sizes = [8, 96], strides = [1, 1]} : vector<8x128xf32> to vector<8x96xf32>
    %49 = arith.negf %48 : vector<8x96xf32>
    %50 = math.exp %49 : vector<8x96xf32>
    %cst_15 = arith.constant 1.000000e+00 : f32
    %51 = vector.broadcast %cst_15 : f32 to vector<8x96xf32>
    %52 = arith.addf %51, %50 : vector<8x96xf32>
    %53 = arith.divf %51, %52 : vector<8x96xf32>
    %54 = vector.extract_strided_slice %47 {offsets = [0, 96], sizes = [8, 32], strides = [1, 1]} : vector<8x128xf32> to vector<8x32xf32>
    %55 = math.tanh %54 : vector<8x32xf32>
    %56 = vector.extract_strided_slice %53 {offsets = [0, 0], sizes = [8, 32], strides = [1, 1]} : vector<8x96xf32> to vector<8x32xf32>
    %57 = vector.extract_strided_slice %53 {offsets = [0, 32], sizes = [8, 32], strides = [1, 1]} : vector<8x96xf32> to vector<8x32xf32>
    %58 = vector.extract_strided_slice %53 {offsets = [0, 64], sizes = [8, 32], strides = [1, 1]} : vector<8x96xf32> to vector<8x32xf32>
    %59 = arith.mulf %57, %40 : vector<8x32xf32>
    %60 = arith.mulf %56, %55 : vector<8x32xf32>
    %61 = arith.addf %59, %60 : vector<8x32xf32>
    %62 = math.tanh %61 : vector<8x32xf32>
    %63 = arith.mulf %58, %62 : vector<8x32xf32>
    %64 = arith.truncf %63 : vector<8x32xf32> to vector<8x32xbf16>
    %c16 = arith.constant 16 : index
    %c0_16 = arith.constant 0 : index
    %65 = vector.load %arg11[%c16, %c0_16] : memref<64x32xbf16, #tpu.memory_space<vmem>>, vector<8x32xbf16>
    tpu.vector_store %arg11[%c16, %c0_16], %64 {strides = array<i32>} : memref<64x32xbf16, #tpu.memory_space<vmem>>, vector<8x32xbf16>,
    %66 = vector.extract_strided_slice %7 {offsets = [24, 0], sizes = [8, 128], strides = [1, 1]} : vector<64x128xf32> to vector<8x128xf32>
    %cst_17 = arith.constant dense<0.000000e+00> : vector<8x128xf32>
    %67 = tpu.matmul %64, %1, %cst_17 {dimension_numbers = #tpu.dot_dimension_numbers<[1], [0], [0], [1], [0, 0, 1, 1], [], []>} : vector<8x32xbf16>, vector<32x128xbf16>, vector<8x128xf32> -> vector<8x128xf32>
    %68 = arith.addf %66, %67 : vector<8x128xf32>
    %69 = vector.extract_strided_slice %68 {offsets = [0, 0], sizes = [8, 96], strides = [1, 1]} : vector<8x128xf32> to vector<8x96xf32>
    %70 = arith.negf %69 : vector<8x96xf32>
    %71 = math.exp %70 : vector<8x96xf32>
    %cst_18 = arith.constant 1.000000e+00 : f32
    %72 = vector.broadcast %cst_18 : f32 to vector<8x96xf32>
    %73 = arith.addf %72, %71 : vector<8x96xf32>
    %74 = arith.divf %72, %73 : vector<8x96xf32>
    %75 = vector.extract_strided_slice %68 {offsets = [0, 96], sizes = [8, 32], strides = [1, 1]} : vector<8x128xf32> to vector<8x32xf32>
    %76 = math.tanh %75 : vector<8x32xf32>
    %77 = vector.extract_strided_slice %74 {offsets = [0, 0], sizes = [8, 32], strides = [1, 1]} : vector<8x96xf32> to vector<8x32xf32>
    %78 = vector.extract_strided_slice %74 {offsets = [0, 32], sizes = [8, 32], strides = [1, 1]} : vector<8x96xf32> to vector<8x32xf32>
    %79 = vector.extract_strided_slice %74 {offsets = [0, 64], sizes = [8, 32], strides = [1, 1]} : vector<8x96xf32> to vector<8x32xf32>
    %80 = arith.mulf %78, %61 : vector<8x32xf32>
    %81 = arith.mulf %77, %76 : vector<8x32xf32>
    %82 = arith.addf %80, %81 : vector<8x32xf32>
    %83 = math.tanh %82 : vector<8x32xf32>
    %84 = arith.mulf %79, %83 : vector<8x32xf32>
    %85 = arith.truncf %84 : vector<8x32xf32> to vector<8x32xbf16>
    %c24 = arith.constant 24 : index
    %c0_19 = arith.constant 0 : index
    %86 = vector.load %arg11[%c24, %c0_19] : memref<64x32xbf16, #tpu.memory_space<vmem>>, vector<8x32xbf16>
    tpu.vector_store %arg11[%c24, %c0_19], %85 {strides = array<i32>} : memref<64x32xbf16, #tpu.memory_space<vmem>>, vector<8x32xbf16>,
    %87 = vector.extract_strided_slice %7 {offsets = [32, 0], sizes = [8, 128], strides = [1, 1]} : vector<64x128xf32> to vector<8x128xf32>
    %cst_20 = arith.constant dense<0.000000e+00> : vector<8x128xf32>
    %88 = tpu.matmul %85, %1, %cst_20 {dimension_numbers = #tpu.dot_dimension_numbers<[1], [0], [0], [1], [0, 0, 1, 1], [], []>} : vector<8x32xbf16>, vector<32x128xbf16>, vector<8x128xf32> -> vector<8x128xf32>
    %89 = arith.addf %87, %88 : vector<8x128xf32>
    %90 = vector.extract_strided_slice %89 {offsets = [0, 0], sizes = [8, 96], strides = [1, 1]} : vector<8x128xf32> to vector<8x96xf32>
    %91 = arith.negf %90 : vector<8x96xf32>
    %92 = math.exp %91 : vector<8x96xf32>
    %cst_21 = arith.constant 1.000000e+00 : f32
    %93 = vector.broadcast %cst_21 : f32 to vector<8x96xf32>
    %94 = arith.addf %93, %92 : vector<8x96xf32>
    %95 = arith.divf %93, %94 : vector<8x96xf32>
    %96 = vector.extract_strided_slice %89 {offsets = [0, 96], sizes = [8, 32], strides = [1, 1]} : vector<8x128xf32> to vector<8x32xf32>
    %97 = math.tanh %96 : vector<8x32xf32>
    %98 = vector.extract_strided_slice %95 {offsets = [0, 0], sizes = [8, 32], strides = [1, 1]} : vector<8x96xf32> to vector<8x32xf32>
    %99 = vector.extract_strided_slice %95 {offsets = [0, 32], sizes = [8, 32], strides = [1, 1]} : vector<8x96xf32> to vector<8x32xf32>
    %100 = vector.extract_strided_slice %95 {offsets = [0, 64], sizes = [8, 32], strides = [1, 1]} : vector<8x96xf32> to vector<8x32xf32>
    %101 = arith.mulf %99, %82 : vector<8x32xf32>
    %102 = arith.mulf %98, %97 : vector<8x32xf32>
    %103 = arith.addf %101, %102 : vector<8x32xf32>
    %104 = math.tanh %103 : vector<8x32xf32>
    %105 = arith.mulf %100, %104 : vector<8x32xf32>
    %106 = arith.truncf %105 : vector<8x32xf32> to vector<8x32xbf16>
    %c32 = arith.constant 32 : index
    %c0_22 = arith.constant 0 : index
    %107 = vector.load %arg11[%c32, %c0_22] : memref<64x32xbf16, #tpu.memory_space<vmem>>, vector<8x32xbf16>
    tpu.vector_store %arg11[%c32, %c0_22], %106 {strides = array<i32>} : memref<64x32xbf16, #tpu.memory_space<vmem>>, vector<8x32xbf16>,
    %108 = vector.extract_strided_slice %7 {offsets = [40, 0], sizes = [8, 128], strides = [1, 1]} : vector<64x128xf32> to vector<8x128xf32>
    %cst_23 = arith.constant dense<0.000000e+00> : vector<8x128xf32>
    %109 = tpu.matmul %106, %1, %cst_23 {dimension_numbers = #tpu.dot_dimension_numbers<[1], [0], [0], [1], [0, 0, 1, 1], [], []>} : vector<8x32xbf16>, vector<32x128xbf16>, vector<8x128xf32> -> vector<8x128xf32>
    %110 = arith.addf %108, %109 : vector<8x128xf32>
    %111 = vector.extract_strided_slice %110 {offsets = [0, 0], sizes = [8, 96], strides = [1, 1]} : vector<8x128xf32> to vector<8x96xf32>
    %112 = arith.negf %111 : vector<8x96xf32>
    %113 = math.exp %112 : vector<8x96xf32>
    %cst_24 = arith.constant 1.000000e+00 : f32
    %114 = vector.broadcast %cst_24 : f32 to vector<8x96xf32>
    %115 = arith.addf %114, %113 : vector<8x96xf32>
    %116 = arith.divf %114, %115 : vector<8x96xf32>
    %117 = vector.extract_strided_slice %110 {offsets = [0, 96], sizes = [8, 32], strides = [1, 1]} : vector<8x128xf32> to vector<8x32xf32>
    %118 = math.tanh %117 : vector<8x32xf32>
    %119 = vector.extract_strided_slice %116 {offsets = [0, 0], sizes = [8, 32], strides = [1, 1]} : vector<8x96xf32> to vector<8x32xf32>
    %120 = vector.extract_strided_slice %116 {offsets = [0, 32], sizes = [8, 32], strides = [1, 1]} : vector<8x96xf32> to vector<8x32xf32>
    %121 = vector.extract_strided_slice %116 {offsets = [0, 64], sizes = [8, 32], strides = [1, 1]} : vector<8x96xf32> to vector<8x32xf32>
    %122 = arith.mulf %120, %103 : vector<8x32xf32>
    %123 = arith.mulf %119, %118 : vector<8x32xf32>
    %124 = arith.addf %122, %123 : vector<8x32xf32>
    %125 = math.tanh %124 : vector<8x32xf32>
    %126 = arith.mulf %121, %125 : vector<8x32xf32>
    %127 = arith.truncf %126 : vector<8x32xf32> to vector<8x32xbf16>
    %c40 = arith.constant 40 : index
    %c0_25 = arith.constant 0 : index
    %128 = vector.load %arg11[%c40, %c0_25] : memref<64x32xbf16, #tpu.memory_space<vmem>>, vector<8x32xbf16>
    tpu.vector_store %arg11[%c40, %c0_25], %127 {strides = array<i32>} : memref<64x32xbf16, #tpu.memory_space<vmem>>, vector<8x32xbf16>,
    %129 = vector.extract_strided_slice %7 {offsets = [48, 0], sizes = [8, 128], strides = [1, 1]} : vector<64x128xf32> to vector<8x128xf32>
    %cst_26 = arith.constant dense<0.000000e+00> : vector<8x128xf32>
    %130 = tpu.matmul %127, %1, %cst_26 {dimension_numbers = #tpu.dot_dimension_numbers<[1], [0], [0], [1], [0, 0, 1, 1], [], []>} : vector<8x32xbf16>, vector<32x128xbf16>, vector<8x128xf32> -> vector<8x128xf32>
    %131 = arith.addf %129, %130 : vector<8x128xf32>
    %132 = vector.extract_strided_slice %131 {offsets = [0, 0], sizes = [8, 96], strides = [1, 1]} : vector<8x128xf32> to vector<8x96xf32>
    %133 = arith.negf %132 : vector<8x96xf32>
    %134 = math.exp %133 : vector<8x96xf32>
    %cst_27 = arith.constant 1.000000e+00 : f32
    %135 = vector.broadcast %cst_27 : f32 to vector<8x96xf32>
    %136 = arith.addf %135, %134 : vector<8x96xf32>
    %137 = arith.divf %135, %136 : vector<8x96xf32>
    %138 = vector.extract_strided_slice %131 {offsets = [0, 96], sizes = [8, 32], strides = [1, 1]} : vector<8x128xf32> to vector<8x32xf32>
    %139 = math.tanh %138 : vector<8x32xf32>
    %140 = vector.extract_strided_slice %137 {offsets = [0, 0], sizes = [8, 32], strides = [1, 1]} : vector<8x96xf32> to vector<8x32xf32>
    %141 = vector.extract_strided_slice %137 {offsets = [0, 32], sizes = [8, 32], strides = [1, 1]} : vector<8x96xf32> to vector<8x32xf32>
    %142 = vector.extract_strided_slice %137 {offsets = [0, 64], sizes = [8, 32], strides = [1, 1]} : vector<8x96xf32> to vector<8x32xf32>
    %143 = arith.mulf %141, %124 : vector<8x32xf32>
    %144 = arith.mulf %140, %139 : vector<8x32xf32>
    %145 = arith.addf %143, %144 : vector<8x32xf32>
    %146 = math.tanh %145 : vector<8x32xf32>
    %147 = arith.mulf %142, %146 : vector<8x32xf32>
    %148 = arith.truncf %147 : vector<8x32xf32> to vector<8x32xbf16>
    %c48 = arith.constant 48 : index
    %c0_28 = arith.constant 0 : index
    %149 = vector.load %arg11[%c48, %c0_28] : memref<64x32xbf16, #tpu.memory_space<vmem>>, vector<8x32xbf16>
    tpu.vector_store %arg11[%c48, %c0_28], %148 {strides = array<i32>} : memref<64x32xbf16, #tpu.memory_space<vmem>>, vector<8x32xbf16>,
    %150 = vector.extract_strided_slice %7 {offsets = [56, 0], sizes = [8, 128], strides = [1, 1]} : vector<64x128xf32> to vector<8x128xf32>
    %cst_29 = arith.constant dense<0.000000e+00> : vector<8x128xf32>
    %151 = tpu.matmul %148, %1, %cst_29 {dimension_numbers = #tpu.dot_dimension_numbers<[1], [0], [0], [1], [0, 0, 1, 1], [], []>} : vector<8x32xbf16>, vector<32x128xbf16>, vector<8x128xf32> -> vector<8x128xf32>
    %152 = arith.addf %150, %151 : vector<8x128xf32>
    %153 = vector.extract_strided_slice %152 {offsets = [0, 0], sizes = [8, 96], strides = [1, 1]} : vector<8x128xf32> to vector<8x96xf32>
    %154 = arith.negf %153 : vector<8x96xf32>
    %155 = math.exp %154 : vector<8x96xf32>
    %cst_30 = arith.constant 1.000000e+00 : f32
    %156 = vector.broadcast %cst_30 : f32 to vector<8x96xf32>
    %157 = arith.addf %156, %155 : vector<8x96xf32>
    %158 = arith.divf %156, %157 : vector<8x96xf32>
    %159 = vector.extract_strided_slice %152 {offsets = [0, 96], sizes = [8, 32], strides = [1, 1]} : vector<8x128xf32> to vector<8x32xf32>
    %160 = math.tanh %159 : vector<8x32xf32>
    %161 = vector.extract_strided_slice %158 {offsets = [0, 0], sizes = [8, 32], strides = [1, 1]} : vector<8x96xf32> to vector<8x32xf32>
    %162 = vector.extract_strided_slice %158 {offsets = [0, 32], sizes = [8, 32], strides = [1, 1]} : vector<8x96xf32> to vector<8x32xf32>
    %163 = vector.extract_strided_slice %158 {offsets = [0, 64], sizes = [8, 32], strides = [1, 1]} : vector<8x96xf32> to vector<8x32xf32>
    %164 = arith.mulf %162, %145 : vector<8x32xf32>
    %165 = arith.mulf %161, %160 : vector<8x32xf32>
    %166 = arith.addf %164, %165 : vector<8x32xf32>
    %167 = math.tanh %166 : vector<8x32xf32>
    %168 = arith.mulf %163, %167 : vector<8x32xf32>
    %169 = arith.truncf %168 : vector<8x32xf32> to vector<8x32xbf16>
    %c56 = arith.constant 56 : index
    %c0_31 = arith.constant 0 : index
    %170 = vector.load %arg11[%c56, %c0_31] : memref<64x32xbf16, #tpu.memory_space<vmem>>, vector<8x32xbf16>
    tpu.vector_store %arg11[%c56, %c0_31], %169 {strides = array<i32>} : memref<64x32xbf16, #tpu.memory_space<vmem>>, vector<8x32xbf16>,
    %c0_32 = arith.constant 0 : index
    %c0_33 = arith.constant 0 : index
    %171 = vector.load %arg5[%c0_32, %c0_33] : memref<32x128xbf16, #tpu.memory_space<vmem>>, vector<32x128xbf16>
    %c0_34 = arith.constant 0 : index
    %c0_35 = arith.constant 0 : index
    %172 = vector.load %arg6[%c0_34, %c0_35] : memref<32x128xbf16, #tpu.memory_space<vmem>>, vector<32x128xbf16>
    %c0_36 = arith.constant 0 : index
    %c0_37 = arith.constant 0 : index
    %173 = vector.load %arg7[%c0_36, %c0_37] : memref<1x128xf32, #tpu.memory_space<vmem>>, vector<1x128xf32>
    %c0_38 = arith.constant 0 : index
    %c0_39 = arith.constant 0 : index
    %174 = vector.load %arg11[%c0_38, %c0_39] : memref<64x32xbf16, #tpu.memory_space<vmem>>, vector<64x32xbf16>
    %cst_40 = arith.constant dense<0.000000e+00> : vector<64x128xf32>
    %175 = tpu.matmul %174, %171, %cst_40 {dimension_numbers = #tpu.dot_dimension_numbers<[1], [0], [0], [1], [0, 0, 1, 1], [], []>} : vector<64x32xbf16>, vector<32x128xbf16>, vector<64x128xf32> -> vector<64x128xf32>
    %176 = vector.broadcast %173 : vector<1x128xf32> to vector<64x128xf32>
    %177 = arith.addf %175, %176 : vector<64x128xf32>
    %178 = vector.extract_strided_slice %177 {offsets = [0, 0], sizes = [8, 128], strides = [1, 1]} : vector<64x128xf32> to vector<8x128xf32>
    %179 = vector.extract_strided_slice %178 {offsets = [0, 0], sizes = [8, 96], strides = [1, 1]} : vector<8x128xf32> to vector<8x96xf32>
    %180 = arith.negf %179 : vector<8x96xf32>
    %181 = math.exp %180 : vector<8x96xf32>
    %cst_41 = arith.constant 1.000000e+00 : f32
    %182 = vector.broadcast %cst_41 : f32 to vector<8x96xf32>
    %183 = arith.addf %182, %181 : vector<8x96xf32>
    %184 = arith.divf %182, %183 : vector<8x96xf32>
    %185 = vector.extract_strided_slice %178 {offsets = [0, 96], sizes = [8, 32], strides = [1, 1]} : vector<8x128xf32> to vector<8x32xf32>
    %186 = math.tanh %185 : vector<8x32xf32>
    %187 = vector.extract_strided_slice %184 {offsets = [0, 0], sizes = [8, 32], strides = [1, 1]} : vector<8x96xf32> to vector<8x32xf32>
    %188 = vector.extract_strided_slice %184 {offsets = [0, 64], sizes = [8, 32], strides = [1, 1]} : vector<8x96xf32> to vector<8x32xf32>
    %189 = arith.mulf %187, %186 : vector<8x32xf32>
    %190 = math.tanh %189 : vector<8x32xf32>
    %191 = arith.mulf %188, %190 : vector<8x32xf32>
    %192 = arith.truncf %191 : vector<8x32xf32> to vector<8x32xbf16>
    %193 = vector.extract_strided_slice %177 {offsets = [8, 0], sizes = [8, 128], strides = [1, 1]} : vector<64x128xf32> to vector<8x128xf32>
    %cst_42 = arith.constant dense<0.000000e+00> : vector<8x128xf32>
    %194 = tpu.matmul %192, %172, %cst_42 {dimension_numbers = #tpu.dot_dimension_numbers<[1], [0], [0], [1], [0, 0, 1, 1], [], []>} : vector<8x32xbf16>, vector<32x128xbf16>, vector<8x128xf32> -> vector<8x128xf32>
    %195 = arith.addf %193, %194 : vector<8x128xf32>
    %196 = vector.extract_strided_slice %195 {offsets = [0, 0], sizes = [8, 96], strides = [1, 1]} : vector<8x128xf32> to vector<8x96xf32>
    %197 = arith.negf %196 : vector<8x96xf32>
    %198 = math.exp %197 : vector<8x96xf32>
    %cst_43 = arith.constant 1.000000e+00 : f32
    %199 = vector.broadcast %cst_43 : f32 to vector<8x96xf32>
    %200 = arith.addf %199, %198 : vector<8x96xf32>
    %201 = arith.divf %199, %200 : vector<8x96xf32>
    %202 = vector.extract_strided_slice %195 {offsets = [0, 96], sizes = [8, 32], strides = [1, 1]} : vector<8x128xf32> to vector<8x32xf32>
    %203 = math.tanh %202 : vector<8x32xf32>
    %204 = vector.extract_strided_slice %201 {offsets = [0, 0], sizes = [8, 32], strides = [1, 1]} : vector<8x96xf32> to vector<8x32xf32>
    %205 = vector.extract_strided_slice %201 {offsets = [0, 32], sizes = [8, 32], strides = [1, 1]} : vector<8x96xf32> to vector<8x32xf32>
    %206 = vector.extract_strided_slice %201 {offsets = [0, 64], sizes = [8, 32], strides = [1, 1]} : vector<8x96xf32> to vector<8x32xf32>
    %207 = arith.mulf %205, %189 : vector<8x32xf32>
    %208 = arith.mulf %204, %203 : vector<8x32xf32>
    %209 = arith.addf %207, %208 : vector<8x32xf32>
    %210 = math.tanh %209 : vector<8x32xf32>
    %211 = arith.mulf %206, %210 : vector<8x32xf32>
    %212 = arith.truncf %211 : vector<8x32xf32> to vector<8x32xbf16>
    %213 = vector.extract_strided_slice %177 {offsets = [16, 0], sizes = [8, 128], strides = [1, 1]} : vector<64x128xf32> to vector<8x128xf32>
    %cst_44 = arith.constant dense<0.000000e+00> : vector<8x128xf32>
    %214 = tpu.matmul %212, %172, %cst_44 {dimension_numbers = #tpu.dot_dimension_numbers<[1], [0], [0], [1], [0, 0, 1, 1], [], []>} : vector<8x32xbf16>, vector<32x128xbf16>, vector<8x128xf32> -> vector<8x128xf32>
    %215 = arith.addf %213, %214 : vector<8x128xf32>
    %216 = vector.extract_strided_slice %215 {offsets = [0, 0], sizes = [8, 96], strides = [1, 1]} : vector<8x128xf32> to vector<8x96xf32>
    %217 = arith.negf %216 : vector<8x96xf32>
    %218 = math.exp %217 : vector<8x96xf32>
    %cst_45 = arith.constant 1.000000e+00 : f32
    %219 = vector.broadcast %cst_45 : f32 to vector<8x96xf32>
    %220 = arith.addf %219, %218 : vector<8x96xf32>
    %221 = arith.divf %219, %220 : vector<8x96xf32>
    %222 = vector.extract_strided_slice %215 {offsets = [0, 96], sizes = [8, 32], strides = [1, 1]} : vector<8x128xf32> to vector<8x32xf32>
    %223 = math.tanh %222 : vector<8x32xf32>
    %224 = vector.extract_strided_slice %221 {offsets = [0, 0], sizes = [8, 32], strides = [1, 1]} : vector<8x96xf32> to vector<8x32xf32>
    %225 = vector.extract_strided_slice %221 {offsets = [0, 32], sizes = [8, 32], strides = [1, 1]} : vector<8x96xf32> to vector<8x32xf32>
    %226 = vector.extract_strided_slice %221 {offsets = [0, 64], sizes = [8, 32], strides = [1, 1]} : vector<8x96xf32> to vector<8x32xf32>
    %227 = arith.mulf %225, %209 : vector<8x32xf32>
    %228 = arith.mulf %224, %223 : vector<8x32xf32>
    %229 = arith.addf %227, %228 : vector<8x32xf32>
    %230 = math.tanh %229 : vector<8x32xf32>
    %231 = arith.mulf %226, %230 : vector<8x32xf32>
    %232 = arith.truncf %231 : vector<8x32xf32> to vector<8x32xbf16>
    %233 = vector.extract_strided_slice %177 {offsets = [24, 0], sizes = [8, 128], strides = [1, 1]} : vector<64x128xf32> to vector<8x128xf32>
    %cst_46 = arith.constant dense<0.000000e+00> : vector<8x128xf32>
    %234 = tpu.matmul %232, %172, %cst_46 {dimension_numbers = #tpu.dot_dimension_numbers<[1], [0], [0], [1], [0, 0, 1, 1], [], []>} : vector<8x32xbf16>, vector<32x128xbf16>, vector<8x128xf32> -> vector<8x128xf32>
    %235 = arith.addf %233, %234 : vector<8x128xf32>
    %236 = vector.extract_strided_slice %235 {offsets = [0, 0], sizes = [8, 96], strides = [1, 1]} : vector<8x128xf32> to vector<8x96xf32>
    %237 = arith.negf %236 : vector<8x96xf32>
    %238 = math.exp %237 : vector<8x96xf32>
    %cst_47 = arith.constant 1.000000e+00 : f32
    %239 = vector.broadcast %cst_47 : f32 to vector<8x96xf32>
    %240 = arith.addf %239, %238 : vector<8x96xf32>
    %241 = arith.divf %239, %240 : vector<8x96xf32>
    %242 = vector.extract_strided_slice %235 {offsets = [0, 96], sizes = [8, 32], strides = [1, 1]} : vector<8x128xf32> to vector<8x32xf32>
    %243 = math.tanh %242 : vector<8x32xf32>
    %244 = vector.extract_strided_slice %241 {offsets = [0, 0], sizes = [8, 32], strides = [1, 1]} : vector<8x96xf32> to vector<8x32xf32>
    %245 = vector.extract_strided_slice %241 {offsets = [0, 32], sizes = [8, 32], strides = [1, 1]} : vector<8x96xf32> to vector<8x32xf32>
    %246 = vector.extract_strided_slice %241 {offsets = [0, 64], sizes = [8, 32], strides = [1, 1]} : vector<8x96xf32> to vector<8x32xf32>
    %247 = arith.mulf %245, %229 : vector<8x32xf32>
    %248 = arith.mulf %244, %243 : vector<8x32xf32>
    %249 = arith.addf %247, %248 : vector<8x32xf32>
    %250 = math.tanh %249 : vector<8x32xf32>
    %251 = arith.mulf %246, %250 : vector<8x32xf32>
    %252 = arith.truncf %251 : vector<8x32xf32> to vector<8x32xbf16>
    %253 = vector.extract_strided_slice %177 {offsets = [32, 0], sizes = [8, 128], strides = [1, 1]} : vector<64x128xf32> to vector<8x128xf32>
    %cst_48 = arith.constant dense<0.000000e+00> : vector<8x128xf32>
    %254 = tpu.matmul %252, %172, %cst_48 {dimension_numbers = #tpu.dot_dimension_numbers<[1], [0], [0], [1], [0, 0, 1, 1], [], []>} : vector<8x32xbf16>, vector<32x128xbf16>, vector<8x128xf32> -> vector<8x128xf32>
    %255 = arith.addf %253, %254 : vector<8x128xf32>
    %256 = vector.extract_strided_slice %255 {offsets = [0, 0], sizes = [8, 96], strides = [1, 1]} : vector<8x128xf32> to vector<8x96xf32>
    %257 = arith.negf %256 : vector<8x96xf32>
    %258 = math.exp %257 : vector<8x96xf32>
    %cst_49 = arith.constant 1.000000e+00 : f32
    %259 = vector.broadcast %cst_49 : f32 to vector<8x96xf32>
    %260 = arith.addf %259, %258 : vector<8x96xf32>
    %261 = arith.divf %259, %260 : vector<8x96xf32>
    %262 = vector.extract_strided_slice %255 {offsets = [0, 96], sizes = [8, 32], strides = [1, 1]} : vector<8x128xf32> to vector<8x32xf32>
    %263 = math.tanh %262 : vector<8x32xf32>
    %264 = vector.extract_strided_slice %261 {offsets = [0, 0], sizes = [8, 32], strides = [1, 1]} : vector<8x96xf32> to vector<8x32xf32>
    %265 = vector.extract_strided_slice %261 {offsets = [0, 32], sizes = [8, 32], strides = [1, 1]} : vector<8x96xf32> to vector<8x32xf32>
    %266 = vector.extract_strided_slice %261 {offsets = [0, 64], sizes = [8, 32], strides = [1, 1]} : vector<8x96xf32> to vector<8x32xf32>
    %267 = arith.mulf %265, %249 : vector<8x32xf32>
    %268 = arith.mulf %264, %263 : vector<8x32xf32>
    %269 = arith.addf %267, %268 : vector<8x32xf32>
    %270 = math.tanh %269 : vector<8x32xf32>
    %271 = arith.mulf %266, %270 : vector<8x32xf32>
    %272 = arith.truncf %271 : vector<8x32xf32> to vector<8x32xbf16>
    %273 = vector.extract_strided_slice %177 {offsets = [40, 0], sizes = [8, 128], strides = [1, 1]} : vector<64x128xf32> to vector<8x128xf32>
    %cst_50 = arith.constant dense<0.000000e+00> : vector<8x128xf32>
    %274 = tpu.matmul %272, %172, %cst_50 {dimension_numbers = #tpu.dot_dimension_numbers<[1], [0], [0], [1], [0, 0, 1, 1], [], []>} : vector<8x32xbf16>, vector<32x128xbf16>, vector<8x128xf32> -> vector<8x128xf32>
    %275 = arith.addf %273, %274 : vector<8x128xf32>
    %276 = vector.extract_strided_slice %275 {offsets = [0, 0], sizes = [8, 96], strides = [1, 1]} : vector<8x128xf32> to vector<8x96xf32>
    %277 = arith.negf %276 : vector<8x96xf32>
    %278 = math.exp %277 : vector<8x96xf32>
    %cst_51 = arith.constant 1.000000e+00 : f32
    %279 = vector.broadcast %cst_51 : f32 to vector<8x96xf32>
    %280 = arith.addf %279, %278 : vector<8x96xf32>
    %281 = arith.divf %279, %280 : vector<8x96xf32>
    %282 = vector.extract_strided_slice %275 {offsets = [0, 96], sizes = [8, 32], strides = [1, 1]} : vector<8x128xf32> to vector<8x32xf32>
    %283 = math.tanh %282 : vector<8x32xf32>
    %284 = vector.extract_strided_slice %281 {offsets = [0, 0], sizes = [8, 32], strides = [1, 1]} : vector<8x96xf32> to vector<8x32xf32>
    %285 = vector.extract_strided_slice %281 {offsets = [0, 32], sizes = [8, 32], strides = [1, 1]} : vector<8x96xf32> to vector<8x32xf32>
    %286 = vector.extract_strided_slice %281 {offsets = [0, 64], sizes = [8, 32], strides = [1, 1]} : vector<8x96xf32> to vector<8x32xf32>
    %287 = arith.mulf %285, %269 : vector<8x32xf32>
    %288 = arith.mulf %284, %283 : vector<8x32xf32>
    %289 = arith.addf %287, %288 : vector<8x32xf32>
    %290 = math.tanh %289 : vector<8x32xf32>
    %291 = arith.mulf %286, %290 : vector<8x32xf32>
    %292 = arith.truncf %291 : vector<8x32xf32> to vector<8x32xbf16>
    %293 = vector.extract_strided_slice %177 {offsets = [48, 0], sizes = [8, 128], strides = [1, 1]} : vector<64x128xf32> to vector<8x128xf32>
    %cst_52 = arith.constant dense<0.000000e+00> : vector<8x128xf32>
    %294 = tpu.matmul %292, %172, %cst_52 {dimension_numbers = #tpu.dot_dimension_numbers<[1], [0], [0], [1], [0, 0, 1, 1], [], []>} : vector<8x32xbf16>, vector<32x128xbf16>, vector<8x128xf32> -> vector<8x128xf32>
    %295 = arith.addf %293, %294 : vector<8x128xf32>
    %296 = vector.extract_strided_slice %295 {offsets = [0, 0], sizes = [8, 96], strides = [1, 1]} : vector<8x128xf32> to vector<8x96xf32>
    %297 = arith.negf %296 : vector<8x96xf32>
    %298 = math.exp %297 : vector<8x96xf32>
    %cst_53 = arith.constant 1.000000e+00 : f32
    %299 = vector.broadcast %cst_53 : f32 to vector<8x96xf32>
    %300 = arith.addf %299, %298 : vector<8x96xf32>
    %301 = arith.divf %299, %300 : vector<8x96xf32>
    %302 = vector.extract_strided_slice %295 {offsets = [0, 96], sizes = [8, 32], strides = [1, 1]} : vector<8x128xf32> to vector<8x32xf32>
    %303 = math.tanh %302 : vector<8x32xf32>
    %304 = vector.extract_strided_slice %301 {offsets = [0, 0], sizes = [8, 32], strides = [1, 1]} : vector<8x96xf32> to vector<8x32xf32>
    %305 = vector.extract_strided_slice %301 {offsets = [0, 32], sizes = [8, 32], strides = [1, 1]} : vector<8x96xf32> to vector<8x32xf32>
    %306 = vector.extract_strided_slice %301 {offsets = [0, 64], sizes = [8, 32], strides = [1, 1]} : vector<8x96xf32> to vector<8x32xf32>
    %307 = arith.mulf %305, %289 : vector<8x32xf32>
    %308 = arith.mulf %304, %303 : vector<8x32xf32>
    %309 = arith.addf %307, %308 : vector<8x32xf32>
    %310 = math.tanh %309 : vector<8x32xf32>
    %311 = arith.mulf %306, %310 : vector<8x32xf32>
    %312 = arith.truncf %311 : vector<8x32xf32> to vector<8x32xbf16>
    %313 = vector.extract_strided_slice %177 {offsets = [56, 0], sizes = [8, 128], strides = [1, 1]} : vector<64x128xf32> to vector<8x128xf32>
    %cst_54 = arith.constant dense<0.000000e+00> : vector<8x128xf32>
    %314 = tpu.matmul %312, %172, %cst_54 {dimension_numbers = #tpu.dot_dimension_numbers<[1], [0], [0], [1], [0, 0, 1, 1], [], []>} : vector<8x32xbf16>, vector<32x128xbf16>, vector<8x128xf32> -> vector<8x128xf32>
    %315 = arith.addf %313, %314 : vector<8x128xf32>
    %316 = vector.extract_strided_slice %315 {offsets = [0, 0], sizes = [8, 96], strides = [1, 1]} : vector<8x128xf32> to vector<8x96xf32>
    %317 = arith.negf %316 : vector<8x96xf32>
    %318 = math.exp %317 : vector<8x96xf32>
    %cst_55 = arith.constant 1.000000e+00 : f32
    %319 = vector.broadcast %cst_55 : f32 to vector<8x96xf32>
    %320 = arith.addf %319, %318 : vector<8x96xf32>
    %321 = arith.divf %319, %320 : vector<8x96xf32>
    %322 = vector.extract_strided_slice %315 {offsets = [0, 96], sizes = [8, 32], strides = [1, 1]} : vector<8x128xf32> to vector<8x32xf32>
    %323 = math.tanh %322 : vector<8x32xf32>
    %324 = vector.extract_strided_slice %321 {offsets = [0, 0], sizes = [8, 32], strides = [1, 1]} : vector<8x96xf32> to vector<8x32xf32>
    %325 = vector.extract_strided_slice %321 {offsets = [0, 32], sizes = [8, 32], strides = [1, 1]} : vector<8x96xf32> to vector<8x32xf32>
    %326 = vector.extract_strided_slice %321 {offsets = [0, 64], sizes = [8, 32], strides = [1, 1]} : vector<8x96xf32> to vector<8x32xf32>
    %327 = arith.mulf %325, %309 : vector<8x32xf32>
    %328 = arith.mulf %324, %323 : vector<8x32xf32>
    %329 = arith.addf %327, %328 : vector<8x32xf32>
    %330 = math.tanh %329 : vector<8x32xf32>
    %331 = arith.mulf %326, %330 : vector<8x32xf32>
    %332 = arith.truncf %331 : vector<8x32xf32> to vector<8x32xbf16>
    %c0_56 = arith.constant 0 : index
    %c0_57 = arith.constant 0 : index
    %333 = vector.load %arg8[%c0_56, %c0_57] : memref<32x3xbf16, #tpu.memory_space<vmem>>, vector<32x3xbf16>
    %cst_58 = arith.constant dense<0.000000e+00> : vector<8x3xf32>
    %334 = tpu.matmul %332, %333, %cst_58 {dimension_numbers = #tpu.dot_dimension_numbers<[1], [0], [0], [1], [0, 0, 1, 1], [], []>} : vector<8x32xbf16>, vector<32x3xbf16>, vector<8x3xf32> -> vector<8x3xf32>
    %c0_59 = arith.constant 0 : index
    %c0_60 = arith.constant 0 : index
    %335 = vector.load %arg9[%c0_59, %c0_60] : memref<1x3xf32, #tpu.memory_space<vmem>>, vector<1x3xf32>
    %336 = vector.broadcast %335 : vector<1x3xf32> to vector<8x3xf32>
    %337 = arith.addf %334, %336 : vector<8x3xf32>
    %c0_61 = arith.constant 0 : index
    %c0_62 = arith.constant 0 : index
    %338 = vector.load %arg10[%c0_61, %c0_62] : memref<8x3xf32, #tpu.memory_space<vmem>>, vector<8x3xf32>
    tpu.vector_store %arg10[%c0_61, %c0_62], %337 {strides = array<i32>} : memref<8x3xf32, #tpu.memory_space<vmem>>, vector<8x3xf32>,
    return
  }
  func.func @transform_0(%arg0: i32) -> (i32, i32, i32) {
    %c0_i32 = arith.constant 0 : i32
    %c0_i32_0 = arith.constant 0 : i32
    %c0_i32_1 = arith.constant 0 : i32
    return %arg0, %c0_i32, %c0_i32_0 : i32, i32, i32
  }
  func.func @transform_1(%arg0: i32) -> (i32, i32) {
    %c0_i32 = arith.constant 0 : i32
    %c0_i32_0 = arith.constant 0 : i32
    %c0_i32_1 = arith.constant 0 : i32
    return %c0_i32, %c0_i32_0 : i32, i32
  }
  func.func @transform_2(%arg0: i32) -> (i32, i32) {
    %c0_i32 = arith.constant 0 : i32
    %c0_i32_0 = arith.constant 0 : i32
    %c0_i32_1 = arith.constant 0 : i32
    return %c0_i32, %c0_i32_0 : i32, i32
  }
  func.func @transform_3(%arg0: i32) -> (i32, i32) {
    %c0_i32 = arith.constant 0 : i32
    %c0_i32_0 = arith.constant 0 : i32
    %c0_i32_1 = arith.constant 0 : i32
    return %c0_i32, %c0_i32_0 : i32, i32
  }
  func.func @transform_4(%arg0: i32) -> (i32, i32) {
    %c0_i32 = arith.constant 0 : i32
    %c0_i32_0 = arith.constant 0 : i32
    %c0_i32_1 = arith.constant 0 : i32
    return %c0_i32, %c0_i32_0 : i32, i32
  }
  func.func @transform_5(%arg0: i32) -> (i32, i32) {
    %c0_i32 = arith.constant 0 : i32
    %c0_i32_0 = arith.constant 0 : i32
    %c0_i32_1 = arith.constant 0 : i32
    return %c0_i32, %c0_i32_0 : i32, i32
  }
  func.func @transform_6(%arg0: i32) -> (i32, i32) {
    %c0_i32 = arith.constant 0 : i32
    %c0_i32_0 = arith.constant 0 : i32
    %c0_i32_1 = arith.constant 0 : i32
    return %c0_i32, %c0_i32_0 : i32, i32
  }
  func.func @transform_7(%arg0: i32) -> (i32, i32) {
    %c0_i32 = arith.constant 0 : i32
    %c0_i32_0 = arith.constant 0 : i32
    %c0_i32_1 = arith.constant 0 : i32
    return %c0_i32, %c0_i32_0 : i32, i32
  }
  func.func @transform_8(%arg0: i32) -> (i32, i32) {
    %c0_i32 = arith.constant 0 : i32
    %c0_i32_0 = arith.constant 0 : i32
    %c0_i32_1 = arith.constant 0 : i32
    return %c0_i32, %c0_i32_0 : i32, i32
  }
  func.func @transform_9(%arg0: i32) -> (i32, i32) {
    %c0_i32 = arith.constant 0 : i32
    %c0_i32_0 = arith.constant 0 : i32
    return %arg0, %c0_i32 : i32, i32
  }
}

</mosaic_0001>

<llo_original>
// kernel: tpu_custom_call.1
$region0: #{tpu_custom_call.1}
  #allocation0 [shape = 'u32[]', space=smem, size = 0x4, offset = 0x4, fixed_abs, tag = 'smem constant byte address 0x4 - core index']
  #allocation1 [shape = 'u32[144,128]{1,0:T(1,128)}', space=vmem, size = 0x12000, scoped, tag = 'internal scratch']
  #allocation2 [shape = 'bf16[64,32]{1,0:T(16,128)(2,1)}', space=vmem, size = 0x4000, scoped, tag = 'scratch operand']
  %s0 = inlined_call_operand.vmem [shape: bf16[1,64,4], index: 0, kind: input, shape index: {}]
  %s1 = inlined_call_operand.vmem [shape: bf16[4,128], index: 1, kind: input, shape index: {}]
  %s2 = inlined_call_operand.vmem [shape: bf16[32,128], index: 2, kind: input, shape index: {}]
  %s3 = inlined_call_operand.vmem [shape: f32[1,128], index: 3, kind: input, shape index: {}]
  %s4 = inlined_call_operand.vmem [shape: bf16[32,128], index: 4, kind: input, shape index: {}]
  %s5 = inlined_call_operand.vmem [shape: bf16[32,128], index: 5, kind: input, shape index: {}]
  %s6 = inlined_call_operand.vmem [shape: f32[1,128], index: 6, kind: input, shape index: {}]
  %s7 = inlined_call_operand.vmem [shape: bf16[32,3], index: 7, kind: input, shape index: {}]
  %s8 = inlined_call_operand.vmem [shape: f32[1,3], index: 8, kind: input, shape index: {}]
  %s9 = inlined_call_operand.vmem [shape: f32[8,3], index: 9, kind: output, shape index: {}]
  %s10 = sld [smem:[#allocation0]]
  $region46: #{tpu_custom_call.1} parent=0
    _
  %s12 = ssub.s32 1, %s10
  %s13 = scalar_select 0, %s12, %s10
  // Predicated region
  $region2: #{tpu_custom_call.1} parent=0 // pred_check
    _
  $region3: #{tpu_custom_call.1} parent=0 // pred_check_branch
    %15 = sbr.rel (0) target = $region5
  $region4: #{tpu_custom_call.1} parent=0 // pred_region
    _
  $region5: #{tpu_custom_call.1} parent=0 // pred_fallthru
    _
  // Predicated region
  $region6: #{tpu_custom_call.1} parent=0 // pred_check
    _
  $region7: #{tpu_custom_call.1} parent=0 // pred_check_branch
    %17 = sbr.rel (0) target = $region9
  $region8: #{tpu_custom_call.1} parent=0 // pred_region
    _
  $region9: #{tpu_custom_call.1} parent=0 // pred_fallthru
    _
  // Predicated region
  $region10: #{tpu_custom_call.1} parent=0 // pred_check
    _
  $region11: #{tpu_custom_call.1} parent=0 // pred_check_branch
    %19 = sbr.rel (0) target = $region13
  $region12: #{tpu_custom_call.1} parent=0 // pred_region
    _
  $region13: #{tpu_custom_call.1} parent=0 // pred_fallthru
    _
  // Predicated region
  $region14: #{tpu_custom_call.1} parent=0 // pred_check
    _
  $region15: #{tpu_custom_call.1} parent=0 // pred_check_branch
    %21 = sbr.rel (0) target = $region17
  $region16: #{tpu_custom_call.1} parent=0 // pred_region
    _
  $region17: #{tpu_custom_call.1} parent=0 // pred_fallthru
    _
  // Predicated region
  $region18: #{tpu_custom_call.1} parent=0 // pred_check
    _
  $region19: #{tpu_custom_call.1} parent=0 // pred_check_branch
    %23 = sbr.rel (0) target = $region21
  $region20: #{tpu_custom_call.1} parent=0 // pred_region
    _
  $region21: #{tpu_custom_call.1} parent=0 // pred_fallthru
    _
  // Predicated region
  $region22: #{tpu_custom_call.1} parent=0 // pred_check
    _
  $region23: #{tpu_custom_call.1} parent=0 // pred_check_branch
    %25 = sbr.rel (0) target = $region25
  $region24: #{tpu_custom_call.1} parent=0 // pred_region
    _
  $region25: #{tpu_custom_call.1} parent=0 // pred_fallthru
    _
  // Predicated region
  $region26: #{tpu_custom_call.1} parent=0 // pred_check
    _
  $region27: #{tpu_custom_call.1} parent=0 // pred_check_branch
    %27 = sbr.rel (0) target = $region29
  $region28: #{tpu_custom_call.1} parent=0 // pred_region
    _
  $region29: #{tpu_custom_call.1} parent=0 // pred_fallthru
    _
  // Predicated region
  $region30: #{tpu_custom_call.1} parent=0 // pred_check
    _
  $region31: #{tpu_custom_call.1} parent=0 // pred_check_branch
    %29 = sbr.rel (0) target = $region33
  $region32: #{tpu_custom_call.1} parent=0 // pred_region
    _
  $region33: #{tpu_custom_call.1} parent=0 // pred_fallthru
    _
  // Predicated region
  $region34: #{tpu_custom_call.1} parent=0 // pred_check
    _
  $region35: #{tpu_custom_call.1} parent=0 // pred_check_branch
    %31 = sbr.rel (0) target = $region37
  $region36: #{tpu_custom_call.1} parent=0 // pred_region
    _
  $region37: #{tpu_custom_call.1} parent=0 // pred_fallthru
    _
  %v33 = vld [vmem:[%s1] sm:$0x3]
  %v34 = vld [vmem:[%s2] sm:$0xf]
  %v35 = vld [vmem:[%s2 + $0x4] sm:$0xf]
  %v36 = vld [vmem:[%s2 + $0x8] sm:$0xf]
  %v37 = vld [vmem:[%s2 + $0xc] sm:$0xf]
  %v38 = vld [vmem:[%s3] sm:$0x1]
  %v39 = vld [vmem:[%s0] sm:$0xf]
  %v40 = vld [vmem:[%s0 + $0x4] sm:$0xf]
  %v41 = vld [vmem:[%s0 + $0x8] sm:$0xf]
  %v42 = vld [vmem:[%s0 + $0xc] sm:$0xf]
  %v43 = vld [vmem:[%s0 + $0x10] sm:$0xf]
  %v44 = vld [vmem:[%s0 + $0x14] sm:$0xf]
  %v45 = vld [vmem:[%s0 + $0x18] sm:$0xf]
  %v46 = vld [vmem:[%s0 + $0x1c] sm:$0xf]
  %v48 = vlaneseq
  %v49 = vshrl.u32 %v48, 7
  %v50 = vsub.s32 0, %v49
  %v51 = vrot.slane %v38, %v50
  %v61 = vunpack.c.l.b16 %v39
  %v62 = vunpack.c.l.b16 %v40
  %v63 = vunpack.c.l.b16 %v41
  %v64 = vunpack.c.l.b16 %v42
  %v65 = vunpack.c.l.b16 %v43
  %v66 = vunpack.c.l.b16 %v44
  %v67 = vunpack.c.l.b16 %v45
  %v68 = vunpack.c.l.b16 %v46
  %v69 = vpack.c.b16 %v62, %v61
  %v70 = vpack.c.b16 %v64, %v63
  %v71 = vpack.c.b16 %v66, %v65
  %v72 = vpack.c.b16 %v68, %v67
  %vm73 = vcmask 31744
  %v75 = vsel %vm73, %v69, 0
  %v78 = vsel %vm73, %v70, 0
  %v81 = vsel %vm73, %v71, 0
  %v84 = vsel %vm73, %v72, 0
  %vm86 = vcmask 1041408
  %v88 = vsel %vm86, %v33, 0
  %90 = vmatprep.subr.bf16.mxu0 0
  %91 = vmatpush1.bf16.msra.mxu0 %v88
  %92 = vmatprep.subr.bf16.mxu0 0
  %93 = vmatpush1.bf16.msra.mxu0 0
  %94 = vmatprep.subr.bf16.mxu0 0
  %95 = vmatpush1.bf16.msra.mxu0 0
  %96 = vmatprep.subr.bf16.mxu0 0
  %97 = vmatpush1.bf16.msra.mxu0 0
  %98 = vmatprep.subr.bf16.mxu0 0
  %99 = vmatpush1.bf16.msra.mxu0 0
  %100 = vmatprep.subr.bf16.mxu0 0
  %101 = vmatpush1.bf16.msra.mxu0 0
  %102 = vmatprep.subr.bf16.mxu0 0
  %103 = vmatpush1.bf16.msra.mxu0 0
  %104 = vmatprep.subr.bf16.mxu0 0
  %105 = vmatpush1.bf16.msra.mxu0 0
  %106 = vmatprep.subr.bf16.mxu0 0
  %107 = vmatpush1.bf16.msra.mxu0 0
  %108 = vmatprep.subr.bf16.mxu0 0
  %109 = vmatpush1.bf16.msra.mxu0 0
  %110 = vmatprep.subr.bf16.mxu0 0
  %111 = vmatpush1.bf16.msra.mxu0 0
  %112 = vmatprep.subr.bf16.mxu0 0
  %113 = vmatpush1.bf16.msra.mxu0 0
  %114 = vmatprep.subr.bf16.mxu0 0
  %115 = vmatpush1.bf16.msra.mxu0 0
  %116 = vmatprep.subr.bf16.mxu0 0
  %117 = vmatpush1.bf16.msra.mxu0 0
  %118 = vmatprep.subr.bf16.mxu0 0
  %119 = vmatpush1.bf16.msra.mxu0 0
  %120 = vmatprep.subr.bf16.mxu0 0
  %121 = vmatpush1.bf16.msra.mxu0 0
  %122 = vmatprep.mubr.bf16.mxu0 0
  %123 = vmatmul.mubr.bf16.gmra.mrb[0].mxu0 %v75
  %v124 = vpop.f32.mrb[0].mxu0
  %v125 = vadd.f32 %v51, %v124
  %v126 = vpop.f32.mrb[0].mxu0
  %v127 = vpop.f32.mrb[0].mxu0
  %v128 = vadd.f32 %v51, %v127
  %v129 = vpop.f32.mrb[0].mxu0
  %130 = vmatprep.mubr.bf16.mxu0 0
  %131 = vmatmul.mubr.bf16.gmra.mrb[0].mxu0 %v78
  %v132 = vpop.f32.mrb[0].mxu0
  %v133 = vadd.f32 %v51, %v132
  %v134 = vpop.f32.mrb[0].mxu0
  %v135 = vpop.f32.mrb[0].mxu0
  %v136 = vadd.f32 %v51, %v135
  %v137 = vpop.f32.mrb[0].mxu0
  %138 = vmatprep.mubr.bf16.mxu0 0
  %139 = vmatmul.mubr.bf16.gmra.mrb[0].mxu0 %v81
  %v140 = vpop.f32.mrb[0].mxu0
  %v141 = vadd.f32 %v51, %v140
  %v142 = vpop.f32.mrb[0].mxu0
  %v143 = vpop.f32.mrb[0].mxu0
  %v144 = vadd.f32 %v51, %v143
  %v145 = vpop.f32.mrb[0].mxu0
  %146 = vmatprep.mubr.bf16.mxu0 0
  %147 = vmatmul.mubr.bf16.gmra.mrb[0].mxu0 %v84
  %v148 = vpop.f32.mrb[0].mxu0
  %v149 = vadd.f32 %v51, %v148
  %v150 = vpop.f32.mrb[0].mxu0
  %v151 = vpop.f32.mrb[0].mxu0
  %v152 = vadd.f32 %v51, %v151
  %v153 = vpop.f32.mrb[0].mxu0
  %154 = vdwg.mxu0
  %v155 = vxor.u32 %v125, 2147483648
  %v156 = vmul.f32 %v155, 1.442695
  %v157 = vpow.pop %v156
  %v158 = vadd.f32 %v157, 1.0
  %v159 = vrcp.pop %v158
  %v160 = vmul.f32 1.0, %v159
  %v161 = vtanh.pop %v125
  %163 = vrot.lane.b32.xlu0 %v161, 32
  %v164 = vpop.permute.xlu0 %163
  %v166 = vmul.f32 %v160, %v164
  %v167 = vtanh.pop %v166
  %169 = vrot.lane.b32.xlu0 %v167, 64
  %v170 = vpop.permute.xlu0 %169
  %v172 = vmul.f32 %v160, %v170
  %v173 = vpack.c.bf16 %v172, %v172
  %175 = vrot.lane.b32.xlu0 %v173, 64
  %v176 = vpop.permute.xlu0 %175
  %vm178 = vcmask 257024
  %179 = vst.msk [vmem:[#allocation2] sm:$0xf] %vm178, %v176
  %v184 = vunpack.c.l.b16 %v34
  %v185 = vunpack.c.l.b16 %v35
  %v186 = vunpack.c.l.b16 %v36
  %v187 = vunpack.c.l.b16 %v37
  %v188 = vpack.c.b16 %v185, %v184
  %v189 = vpack.c.b16 %v187, %v186
  %vm192 = vcmask 261120
  %v194 = vsel %vm192, %v176, 0
  %196 = vmatprep.subr.bf16.mxu0 0
  %197 = vmatpush1.bf16.msra.mxu0 %v188
  %198 = vmatprep.subr.bf16.mxu0 0
  %199 = vmatpush1.bf16.msra.mxu0 %v189
  %200 = vmatprep.subr.bf16.mxu0 0
  %201 = vmatpush1.bf16.msra.mxu0 0
  %202 = vmatprep.subr.bf16.mxu0 0
  %203 = vmatpush1.bf16.msra.mxu0 0
  %204 = vmatprep.subr.bf16.mxu0 0
  %205 = vmatpush1.bf16.msra.mxu0 0
  %206 = vmatprep.subr.bf16.mxu0 0
  %207 = vmatpush1.bf16.msra.mxu0 0
  %208 = vmatprep.subr.bf16.mxu0 0
  %209 = vmatpush1.bf16.msra.mxu0 0
  %210 = vmatprep.subr.bf16.mxu0 0
  %211 = vmatpush1.bf16.msra.mxu0 0
  %212 = vmatprep.subr.bf16.mxu0 0
  %213 = vmatpush1.bf16.msra.mxu0 0
  %214 = vmatprep.subr.bf16.mxu0 0
  %215 = vmatpush1.bf16.msra.mxu0 0
  %216 = vmatprep.subr.bf16.mxu0 0
  %217 = vmatpush1.bf16.msra.mxu0 0
  %218 = vmatprep.subr.bf16.mxu0 0
  %219 = vmatpush1.bf16.msra.mxu0 0
  %220 = vmatprep.subr.bf16.mxu0 0
  %221 = vmatpush1.bf16.msra.mxu0 0
  %222 = vmatprep.subr.bf16.mxu0 0
  %223 = vmatpush1.bf16.msra.mxu0 0
  %224 = vmatprep.subr.bf16.mxu0 0
  %225 = vmatpush1.bf16.msra.mxu0 0
  %226 = vmatprep.subr.bf16.mxu0 0
  %227 = vmatpush1.bf16.msra.mxu0 0
  %228 = vmatprep.mubr.bf16.mxu0 0
  %229 = vmatmul.mubr.bf16.gmra.mrb[0].mxu0 %v194
  %v230 = vpop.f32.mrb[0].mxu0
  %v231 = vadd.f32 0.0, %v230
  %v232 = vpop.f32.mrb[0].mxu0
  %v233 = vpop.f32.mrb[0].mxu0
  %v234 = vpop.f32.mrb[0].mxu0
  %235 = vdwg.mxu0
  %v236 = vadd.f32 %v128, %v231
  %v237 = vxor.u32 %v236, 2147483648
  %v238 = vmul.f32 %v237, 1.442695
  %v239 = vpow.pop %v238
  %v240 = vadd.f32 %v239, 1.0
  %v241 = vrcp.pop %v240
  %v242 = vmul.f32 1.0, %v241
  %v243 = vtanh.pop %v236
  %245 = vrot.lane.b32.xlu0 %v166, 32
  %v246 = vpop.permute.xlu0 %245
  %v248 = vmul.f32 %v242, %v246
  %250 = vrot.lane.b32.xlu0 %v243, 32
  %v251 = vpop.permute.xlu0 %250
  %v253 = vmul.f32 %v242, %v251
  %255 = vrot.lane.b32.xlu0 %v253, 32
  %v256 = vpop.permute.xlu0 %255
  %v258 = vadd.f32 %v248, %v256
  %v259 = vtanh.pop %v258
  %261 = vrot.lane.b32.xlu0 %v259, 32
  %v262 = vpop.permute.xlu0 %261
  %v264 = vmul.f32 %v242, %v262
  %v265 = vpack.c.bf16 %v264, %v264
  %v267 = vrot.slane %v265, 4
  %268 = vrot.lane.b32.xlu0 %v267, 64
  %v269 = vpop.permute.xlu0 %268
  %vm271 = vcmask 261124
  %272 = vst.msk [vmem:[#allocation2] sm:$0xf0] %vm271, %v269
  %273 = vrot.lane.b32.xlu0 %v265, 64
  %v274 = vpop.permute.xlu0 %273
  %v276 = vsel %vm192, %v274, 0
  %278 = vmatprep.subr.bf16.mxu0 0
  %279 = vmatpush1.bf16.msra.mxu0 %v188
  %280 = vmatprep.subr.bf16.mxu0 0
  %281 = vmatpush1.bf16.msra.mxu0 %v189
  %282 = vmatprep.subr.bf16.mxu0 0
  %283 = vmatpush1.bf16.msra.mxu0 0
  %284 = vmatprep.subr.bf16.mxu0 0
  %285 = vmatpush1.bf16.msra.mxu0 0
  %286 = vmatprep.subr.bf16.mxu0 0
  %287 = vmatpush1.bf16.msra.mxu0 0
  %288 = vmatprep.subr.bf16.mxu0 0
  %289 = vmatpush1.bf16.msra.mxu0 0
  %290 = vmatprep.subr.bf16.mxu0 0
  %291 = vmatpush1.bf16.msra.mxu0 0
  %292 = vmatprep.subr.bf16.mxu0 0
  %293 = vmatpush1.bf16.msra.mxu0 0
  %294 = vmatprep.subr.bf16.mxu0 0
  %295 = vmatpush1.bf16.msra.mxu0 0
  %296 = vmatprep.subr.bf16.mxu0 0
  %297 = vmatpush1.bf16.msra.mxu0 0
  %298 = vmatprep.subr.bf16.mxu0 0
  %299 = vmatpush1.bf16.msra.mxu0 0
  %300 = vmatprep.subr.bf16.mxu0 0
  %301 = vmatpush1.bf16.msra.mxu0 0
  %302 = vmatprep.subr.bf16.mxu0 0
  %303 = vmatpush1.bf16.msra.mxu0 0
  %304 = vmatprep.subr.bf16.mxu0 0
  %305 = vmatpush1.bf16.msra.mxu0 0
  %306 = vmatprep.subr.bf16.mxu0 0
  %307 = vmatpush1.bf16.msra.mxu0 0
  %308 = vmatprep.subr.bf16.mxu0 0
  %309 = vmatpush1.bf16.msra.mxu0 0
  %310 = vmatprep.mubr.bf16.mxu0 0
  %311 = vmatmul.mubr.bf16.gmra.mrb[0].mxu0 %v276
  %v312 = vpop.f32.mrb[0].mxu0
  %v313 = vadd.f32 0.0, %v312
  %v314 = vpop.f32.mrb[0].mxu0
  %v315 = vpop.f32.mrb[0].mxu0
  %v316 = vpop.f32.mrb[0].mxu0
  %317 = vdwg.mxu0
  %v318 = vadd.f32 %v133, %v313
  %v319 = vxor.u32 %v318, 2147483648
  %v320 = vmul.f32 %v319, 1.442695
  %v321 = vpow.pop %v320
  %v322 = vadd.f32 %v321, 1.0
  %v323 = vrcp.pop %v322
  %v324 = vmul.f32 1.0, %v323
  %v325 = vtanh.pop %v318
  %v326 = vmul.f32 %v324, %v258
  %328 = vrot.lane.b32.xlu0 %v325, 32
  %v329 = vpop.permute.xlu0 %328
  %v331 = vmul.f32 %v324, %v329
  %333 = vrot.lane.b32.xlu0 %v331, 32
  %v334 = vpop.permute.xlu0 %333
  %v336 = vadd.f32 %v326, %v334
  %v337 = vtanh.pop %v336
  %339 = vrot.lane.b32.xlu0 %v337, 32
  %v340 = vpop.permute.xlu0 %339
  %v342 = vmul.f32 %v324, %v340
  %v343 = vpack.c.bf16 %v342, %v342
  %345 = vrot.lane.b32.xlu0 %v343, 64
  %v346 = vpop.permute.xlu0 %345
  %348 = vst.msk [vmem:[#allocation2 + $0x8] sm:$0xf] %vm178, %v346
  %v350 = vsel %vm192, %v346, 0
  %352 = vmatprep.subr.bf16.mxu0 0
  %353 = vmatpush1.bf16.msra.mxu0 %v188
  %354 = vmatprep.subr.bf16.mxu0 0
  %355 = vmatpush1.bf16.msra.mxu0 %v189
  %356 = vmatprep.subr.bf16.mxu0 0
  %357 = vmatpush1.bf16.msra.mxu0 0
  %358 = vmatprep.subr.bf16.mxu0 0
  %359 = vmatpush1.bf16.msra.mxu0 0
  %360 = vmatprep.subr.bf16.mxu0 0
  %361 = vmatpush1.bf16.msra.mxu0 0
  %362 = vmatprep.subr.bf16.mxu0 0
  %363 = vmatpush1.bf16.msra.mxu0 0
  %364 = vmatprep.subr.bf16.mxu0 0
  %365 = vmatpush1.bf16.msra.mxu0 0
  %366 = vmatprep.subr.bf16.mxu0 0
  %367 = vmatpush1.bf16.msra.mxu0 0
  %368 = vmatprep.subr.bf16.mxu0 0
  %369 = vmatpush1.bf16.msra.mxu0 0
  %370 = vmatprep.subr.bf16.mxu0 0
  %371 = vmatpush1.bf16.msra.mxu0 0
  %372 = vmatprep.subr.bf16.mxu0 0
  %373 = vmatpush1.bf16.msra.mxu0 0
  %374 = vmatprep.subr.bf16.mxu0 0
  %375 = vmatpush1.bf16.msra.mxu0 0
  %376 = vmatprep.subr.bf16.mxu0 0
  %377 = vmatpush1.bf16.msra.mxu0 0
  %378 = vmatprep.subr.bf16.mxu0 0
  %379 = vmatpush1.bf16.msra.mxu0 0
  %380 = vmatprep.subr.bf16.mxu0 0
  %381 = vmatpush1.bf16.msra.mxu0 0
  %382 = vmatprep.subr.bf16.mxu0 0
  %383 = vmatpush1.bf16.msra.mxu0 0
  %384 = vmatprep.mubr.bf16.mxu0 0
  %385 = vmatmul.mubr.bf16.gmra.mrb[0].mxu0 %v350
  %v386 = vpop.f32.mrb[0].mxu0
  %v387 = vadd.f32 0.0, %v386
  %v388 = vpop.f32.mrb[0].mxu0
  %v389 = vpop.f32.mrb[0].mxu0
  %v390 = vpop.f32.mrb[0].mxu0
  %391 = vdwg.mxu0
  %v392 = vadd.f32 %v136, %v387
  %v393 = vxor.u32 %v392, 2147483648
  %v394 = vmul.f32 %v393, 1.442695
  %v395 = vpow.pop %v394
  %v396 = vadd.f32 %v395, 1.0
  %v397 = vrcp.pop %v396
  %v398 = vmul.f32 1.0, %v397
  %v399 = vtanh.pop %v392
  %v400 = vmul.f32 %v398, %v336
  %402 = vrot.lane.b32.xlu0 %v399, 32
  %v403 = vpop.permute.xlu0 %402
  %v405 = vmul.f32 %v398, %v403
  %407 = vrot.lane.b32.xlu0 %v405, 32
  %v408 = vpop.permute.xlu0 %407
  %v410 = vadd.f32 %v400, %v408
  %v411 = vtanh.pop %v410
  %413 = vrot.lane.b32.xlu0 %v411, 32
  %v414 = vpop.permute.xlu0 %413
  %v416 = vmul.f32 %v398, %v414
  %v417 = vpack.c.bf16 %v416, %v416
  %v419 = vrot.slane %v417, 4
  %420 = vrot.lane.b32.xlu0 %v419, 64
  %v421 = vpop.permute.xlu0 %420
  %423 = vst.msk [vmem:[#allocation2 + $0x8] sm:$0xf0] %vm271, %v421
  %424 = vrot.lane.b32.xlu0 %v417, 64
  %v425 = vpop.permute.xlu0 %424
  %v427 = vsel %vm192, %v425, 0
  %429 = vmatprep.subr.bf16.mxu0 0
  %430 = vmatpush1.bf16.msra.mxu0 %v188
  %431 = vmatprep.subr.bf16.mxu0 0
  %432 = vmatpush1.bf16.msra.mxu0 %v189
  %433 = vmatprep.subr.bf16.mxu0 0
  %434 = vmatpush1.bf16.msra.mxu0 0
  %435 = vmatprep.subr.bf16.mxu0 0
  %436 = vmatpush1.bf16.msra.mxu0 0
  %437 = vmatprep.subr.bf16.mxu0 0
  %438 = vmatpush1.bf16.msra.mxu0 0
  %439 = vmatprep.subr.bf16.mxu0 0
  %440 = vmatpush1.bf16.msra.mxu0 0
  %441 = vmatprep.subr.bf16.mxu0 0
  %442 = vmatpush1.bf16.msra.mxu0 0
  %443 = vmatprep.subr.bf16.mxu0 0
  %444 = vmatpush1.bf16.msra.mxu0 0
  %445 = vmatprep.subr.bf16.mxu0 0
  %446 = vmatpush1.bf16.msra.mxu0 0
  %447 = vmatprep.subr.bf16.mxu0 0
  %448 = vmatpush1.bf16.msra.mxu0 0
  %449 = vmatprep.subr.bf16.mxu0 0
  %450 = vmatpush1.bf16.msra.mxu0 0
  %451 = vmatprep.subr.bf16.mxu0 0
  %452 = vmatpush1.bf16.msra.mxu0 0
  %453 = vmatprep.subr.bf16.mxu0 0
  %454 = vmatpush1.bf16.msra.mxu0 0
  %455 = vmatprep.subr.bf16.mxu0 0
  %456 = vmatpush1.bf16.msra.mxu0 0
  %457 = vmatprep.subr.bf16.mxu0 0
  %458 = vmatpush1.bf16.msra.mxu0 0
  %459 = vmatprep.subr.bf16.mxu0 0
  %460 = vmatpush1.bf16.msra.mxu0 0
  %461 = vmatprep.mubr.bf16.mxu0 0
  %462 = vmatmul.mubr.bf16.gmra.mrb[0].mxu0 %v427
  %v463 = vpop.f32.mrb[0].mxu0
  %v464 = vadd.f32 0.0, %v463
  %v465 = vpop.f32.mrb[0].mxu0
  %v466 = vpop.f32.mrb[0].mxu0
  %v467 = vpop.f32.mrb[0].mxu0
  %468 = vdwg.mxu0
  %v469 = vadd.f32 %v141, %v464
  %v470 = vxor.u32 %v469, 2147483648
  %v471 = vmul.f32 %v470, 1.442695
  %v472 = vpow.pop %v471
  %v473 = vadd.f32 %v472, 1.0
  %v474 = vrcp.pop %v473
  %v475 = vmul.f32 1.0, %v474
  %v476 = vtanh.pop %v469
  %v477 = vmul.f32 %v475, %v410
  %479 = vrot.lane.b32.xlu0 %v476, 32
  %v480 = vpop.permute.xlu0 %479
  %v482 = vmul.f32 %v475, %v480
  %484 = vrot.lane.b32.xlu0 %v482, 32
  %v485 = vpop.permute.xlu0 %484
  %v487 = vadd.f32 %v477, %v485
  %v488 = vtanh.pop %v487
  %490 = vrot.lane.b32.xlu0 %v488, 32
  %v491 = vpop.permute.xlu0 %490
  %v493 = vmul.f32 %v475, %v491
  %v494 = vpack.c.bf16 %v493, %v493
  %496 = vrot.lane.b32.xlu0 %v494, 64
  %v497 = vpop.permute.xlu0 %496
  %499 = vst.msk [vmem:[#allocation2 + $0x10] sm:$0xf] %vm178, %v497
  %v501 = vsel %vm192, %v497, 0
  %503 = vmatprep.subr.bf16.mxu0 0
  %504 = vmatpush1.bf16.msra.mxu0 %v188
  %505 = vmatprep.subr.bf16.mxu0 0
  %506 = vmatpush1.bf16.msra.mxu0 %v189
  %507 = vmatprep.subr.bf16.mxu0 0
  %508 = vmatpush1.bf16.msra.mxu0 0
  %509 = vmatprep.subr.bf16.mxu0 0
  %510 = vmatpush1.bf16.msra.mxu0 0
  %511 = vmatprep.subr.bf16.mxu0 0
  %512 = vmatpush1.bf16.msra.mxu0 0
  %513 = vmatprep.subr.bf16.mxu0 0
  %514 = vmatpush1.bf16.msra.mxu0 0
  %515 = vmatprep.subr.bf16.mxu0 0
  %516 = vmatpush1.bf16.msra.mxu0 0
  %517 = vmatprep.subr.bf16.mxu0 0
  %518 = vmatpush1.bf16.msra.mxu0 0
  %519 = vmatprep.subr.bf16.mxu0 0
  %520 = vmatpush1.bf16.msra.mxu0 0
  %521 = vmatprep.subr.bf16.mxu0 0
  %522 = vmatpush1.bf16.msra.mxu0 0
  %523 = vmatprep.subr.bf16.mxu0 0
  %524 = vmatpush1.bf16.msra.mxu0 0
  %525 = vmatprep.subr.bf16.mxu0 0
  %526 = vmatpush1.bf16.msra.mxu0 0
  %527 = vmatprep.subr.bf16.mxu0 0
  %528 = vmatpush1.bf16.msra.mxu0 0
  %529 = vmatprep.subr.bf16.mxu0 0
  %530 = vmatpush1.bf16.msra.mxu0 0
  %531 = vmatprep.subr.bf16.mxu0 0
  %532 = vmatpush1.bf16.msra.mxu0 0
  %533 = vmatprep.subr.bf16.mxu0 0
  %534 = vmatpush1.bf16.msra.mxu0 0
  %535 = vmatprep.mubr.bf16.mxu0 0
  %536 = vmatmul.mubr.bf16.gmra.mrb[0].mxu0 %v501
  %v537 = vpop.f32.mrb[0].mxu0
  %v538 = vadd.f32 0.0, %v537
  %v539 = vpop.f32.mrb[0].mxu0
  %v540 = vpop.f32.mrb[0].mxu0
  %v541 = vpop.f32.mrb[0].mxu0
  %542 = vdwg.mxu0
  %v543 = vadd.f32 %v144, %v538
  %v544 = vxor.u32 %v543, 2147483648
  %v545 = vmul.f32 %v544, 1.442695
  %v546 = vpow.pop %v545
  %v547 = vadd.f32 %v546, 1.0
  %v548 = vrcp.pop %v547
  %v549 = vmul.f32 1.0, %v548
  %v550 = vtanh.pop %v543
  %v551 = vmul.f32 %v549, %v487
  %553 = vrot.lane.b32.xlu0 %v550, 32
  %v554 = vpop.permute.xlu0 %553
  %v556 = vmul.f32 %v549, %v554
  %558 = vrot.lane.b32.xlu0 %v556, 32
  %v559 = vpop.permute.xlu0 %558
  %v561 = vadd.f32 %v551, %v559
  %v562 = vtanh.pop %v561
  %564 = vrot.lane.b32.xlu0 %v562, 32
  %v565 = vpop.permute.xlu0 %564
  %v567 = vmul.f32 %v549, %v565
  %v568 = vpack.c.bf16 %v567, %v567
  %v570 = vrot.slane %v568, 4
  %571 = vrot.lane.b32.xlu0 %v570, 64
  %v572 = vpop.permute.xlu0 %571
  %574 = vst.msk [vmem:[#allocation2 + $0x10] sm:$0xf0] %vm271, %v572
  %575 = vrot.lane.b32.xlu0 %v568, 64
  %v576 = vpop.permute.xlu0 %575
  %v578 = vsel %vm192, %v576, 0
  %580 = vmatprep.subr.bf16.mxu0 0
  %581 = vmatpush1.bf16.msra.mxu0 %v188
  %582 = vmatprep.subr.bf16.mxu0 0
  %583 = vmatpush1.bf16.msra.mxu0 %v189
  %584 = vmatprep.subr.bf16.mxu0 0
  %585 = vmatpush1.bf16.msra.mxu0 0
  %586 = vmatprep.subr.bf16.mxu0 0
  %587 = vmatpush1.bf16.msra.mxu0 0
  %588 = vmatprep.subr.bf16.mxu0 0
  %589 = vmatpush1.bf16.msra.mxu0 0
  %590 = vmatprep.subr.bf16.mxu0 0
  %591 = vmatpush1.bf16.msra.mxu0 0
  %592 = vmatprep.subr.bf16.mxu0 0
  %593 = vmatpush1.bf16.msra.mxu0 0
  %594 = vmatprep.subr.bf16.mxu0 0
  %595 = vmatpush1.bf16.msra.mxu0 0
  %596 = vmatprep.subr.bf16.mxu0 0
  %597 = vmatpush1.bf16.msra.mxu0 0
  %598 = vmatprep.subr.bf16.mxu0 0
  %599 = vmatpush1.bf16.msra.mxu0 0
  %600 = vmatprep.subr.bf16.mxu0 0
  %601 = vmatpush1.bf16.msra.mxu0 0
  %602 = vmatprep.subr.bf16.mxu0 0
  %603 = vmatpush1.bf16.msra.mxu0 0
  %604 = vmatprep.subr.bf16.mxu0 0
  %605 = vmatpush1.bf16.msra.mxu0 0
  %606 = vmatprep.subr.bf16.mxu0 0
  %607 = vmatpush1.bf16.msra.mxu0 0
  %608 = vmatprep.subr.bf16.mxu0 0
  %609 = vmatpush1.bf16.msra.mxu0 0
  %610 = vmatprep.subr.bf16.mxu0 0
  %611 = vmatpush1.bf16.msra.mxu0 0
  %612 = vmatprep.mubr.bf16.mxu0 0
  %613 = vmatmul.mubr.bf16.gmra.mrb[0].mxu0 %v578
  %v614 = vpop.f32.mrb[0].mxu0
  %v615 = vadd.f32 0.0, %v614
  %v616 = vpop.f32.mrb[0].mxu0
  %v617 = vpop.f32.mrb[0].mxu0
  %v618 = vpop.f32.mrb[0].mxu0
  %619 = vdwg.mxu0
  %v620 = vadd.f32 %v149, %v615
  %v621 = vxor.u32 %v620, 2147483648
  %v622 = vmul.f32 %v621, 1.442695
  %v623 = vpow.pop %v622
  %v624 = vadd.f32 %v623, 1.0
  %v625 = vrcp.pop %v624
  %v626 = vmul.f32 1.0, %v625
  %v627 = vtanh.pop %v620
  %v628 = vmul.f32 %v626, %v561
  %630 = vrot.lane.b32.xlu0 %v627, 32
  %v631 = vpop.permute.xlu0 %630
  %v633 = vmul.f32 %v626, %v631
  %635 = vrot.lane.b32.xlu0 %v633, 32
  %v636 = vpop.permute.xlu0 %635
  %v638 = vadd.f32 %v628, %v636
  %v639 = vtanh.pop %v638
  %641 = vrot.lane.b32.xlu0 %v639, 32
  %v642 = vpop.permute.xlu0 %641
  %v644 = vmul.f32 %v626, %v642
  %v645 = vpack.c.bf16 %v644, %v644
  %647 = vrot.lane.b32.xlu0 %v645, 64
  %v648 = vpop.permute.xlu0 %647
  %650 = vst.msk [vmem:[#allocation2 + $0x18] sm:$0xf] %vm178, %v648
  %v652 = vsel %vm192, %v648, 0
  %654 = vmatprep.subr.bf16.mxu0 0
  %655 = vmatpush1.bf16.msra.mxu0 %v188
  %656 = vmatprep.subr.bf16.mxu0 0
  %657 = vmatpush1.bf16.msra.mxu0 %v189
  %658 = vmatprep.subr.bf16.mxu0 0
  %659 = vmatpush1.bf16.msra.mxu0 0
  %660 = vmatprep.subr.bf16.mxu0 0
  %661 = vmatpush1.bf16.msra.mxu0 0
  %662 = vmatprep.subr.bf16.mxu0 0
  %663 = vmatpush1.bf16.msra.mxu0 0
  %664 = vmatprep.subr.bf16.mxu0 0
  %665 = vmatpush1.bf16.msra.mxu0 0
  %666 = vmatprep.subr.bf16.mxu0 0
  %667 = vmatpush1.bf16.msra.mxu0 0
  %668 = vmatprep.subr.bf16.mxu0 0
  %669 = vmatpush1.bf16.msra.mxu0 0
  %670 = vmatprep.subr.bf16.mxu0 0
  %671 = vmatpush1.bf16.msra.mxu0 0
  %672 = vmatprep.subr.bf16.mxu0 0
  %673 = vmatpush1.bf16.msra.mxu0 0
  %674 = vmatprep.subr.bf16.mxu0 0
  %675 = vmatpush1.bf16.msra.mxu0 0
  %676 = vmatprep.subr.bf16.mxu0 0
  %677 = vmatpush1.bf16.msra.mxu0 0
  %678 = vmatprep.subr.bf16.mxu0 0
  %679 = vmatpush1.bf16.msra.mxu0 0
  %680 = vmatprep.subr.bf16.mxu0 0
  %681 = vmatpush1.bf16.msra.mxu0 0
  %682 = vmatprep.subr.bf16.mxu0 0
  %683 = vmatpush1.bf16.msra.mxu0 0
  %684 = vmatprep.subr.bf16.mxu0 0
  %685 = vmatpush1.bf16.msra.mxu0 0
  %686 = vmatprep.mubr.bf16.mxu0 0
  %687 = vmatmul.mubr.bf16.gmra.mrb[0].mxu0 %v652
  %v688 = vpop.f32.mrb[0].mxu0
  %v689 = vadd.f32 0.0, %v688
  %v690 = vpop.f32.mrb[0].mxu0
  %v691 = vpop.f32.mrb[0].mxu0
  %v692 = vpop.f32.mrb[0].mxu0
  %693 = vdwg.mxu0
  %v694 = vadd.f32 %v152, %v689
  %v695 = vxor.u32 %v694, 2147483648
  %v696 = vmul.f32 %v695, 1.442695
  %v697 = vpow.pop %v696
  %v698 = vadd.f32 %v697, 1.0
  %v699 = vrcp.pop %v698
  %v700 = vmul.f32 1.0, %v699
  %v701 = vtanh.pop %v694
  %v702 = vmul.f32 %v700, %v638
  %704 = vrot.lane.b32.xlu0 %v701, 32
  %v705 = vpop.permute.xlu0 %704
  %v707 = vmul.f32 %v700, %v705
  %709 = vrot.lane.b32.xlu0 %v707, 32
  %v710 = vpop.permute.xlu0 %709
  %v712 = vadd.f32 %v702, %v710
  %v713 = vtanh.pop %v712
  %715 = vrot.lane.b32.xlu0 %v713, 32
  %v716 = vpop.permute.xlu0 %715
  %v718 = vmul.f32 %v700, %v716
  %v719 = vpack.c.bf16 %v718, %v718
  %v721 = vrot.slane %v719, 4
  %722 = vrot.lane.b32.xlu0 %v721, 64
  %v723 = vpop.permute.xlu0 %722
  %725 = vst.msk [vmem:[#allocation2 + $0x18] sm:$0xf0] %vm271, %v723
  %v726 = vld [vmem:[%s4] sm:$0xf]
  %v727 = vld [vmem:[%s4 + $0x4] sm:$0xf]
  %v728 = vld [vmem:[%s4 + $0x8] sm:$0xf]
  %v729 = vld [vmem:[%s4 + $0xc] sm:$0xf]
  %v730 = vld [vmem:[%s5] sm:$0xf]
  %v731 = vld [vmem:[%s5 + $0x4] sm:$0xf]
  %v732 = vld [vmem:[%s5 + $0x8] sm:$0xf]
  %v733 = vld [vmem:[%s5 + $0xc] sm:$0xf]
  %v734 = vld [vmem:[%s6] sm:$0x1]
  %v735 = vld [vmem:[#allocation2] sm:$0xff]
  %v736 = vld [vmem:[#allocation2 + $0x8] sm:$0xff]
  %v737 = vld [vmem:[#allocation2 + $0x10] sm:$0xff]
  %v738 = vld [vmem:[#allocation2 + $0x18] sm:$0xff]
  %v740 = vlaneseq
  %v741 = vshrl.u32 %v740, 7
  %v742 = vsub.s32 0, %v741
  %v743 = vrot.slane %v734, %v742
  %v749 = vunpack.c.l.b16 %v726
  %v750 = vunpack.c.l.b16 %v727
  %v751 = vunpack.c.l.b16 %v728
  %v752 = vunpack.c.l.b16 %v729
  %v753 = vpack.c.b16 %v750, %v749
  %v754 = vpack.c.b16 %v752, %v751
  %v758 = vsel %vm192, %v735, 0
  %v761 = vsel %vm192, %v736, 0
  %v764 = vsel %vm192, %v737, 0
  %v767 = vsel %vm192, %v738, 0
  %769 = vmatprep.subr.bf16.mxu0 0
  %770 = vmatpush1.bf16.msra.mxu0 %v753
  %771 = vmatprep.subr.bf16.mxu0 0
  %772 = vmatpush1.bf16.msra.mxu0 %v754
  %773 = vmatprep.subr.bf16.mxu0 0
  %774 = vmatpush1.bf16.msra.mxu0 0
  %775 = vmatprep.subr.bf16.mxu0 0
  %776 = vmatpush1.bf16.msra.mxu0 0
  %777 = vmatprep.subr.bf16.mxu0 0
  %778 = vmatpush1.bf16.msra.mxu0 0
  %779 = vmatprep.subr.bf16.mxu0 0
  %780 = vmatpush1.bf16.msra.mxu0 0
  %781 = vmatprep.subr.bf16.mxu0 0
  %782 = vmatpush1.bf16.msra.mxu0 0
  %783 = vmatprep.subr.bf16.mxu0 0
  %784 = vmatpush1.bf16.msra.mxu0 0
  %785 = vmatprep.subr.bf16.mxu0 0
  %786 = vmatpush1.bf16.msra.mxu0 0
  %787 = vmatprep.subr.bf16.mxu0 0
  %788 = vmatpush1.bf16.msra.mxu0 0
  %789 = vmatprep.subr.bf16.mxu0 0
  %790 = vmatpush1.bf16.msra.mxu0 0
  %791 = vmatprep.subr.bf16.mxu0 0
  %792 = vmatpush1.bf16.msra.mxu0 0
  %793 = vmatprep.subr.bf16.mxu0 0
  %794 = vmatpush1.bf16.msra.mxu0 0
  %795 = vmatprep.subr.bf16.mxu0 0
  %796 = vmatpush1.bf16.msra.mxu0 0
  %797 = vmatprep.subr.bf16.mxu0 0
  %798 = vmatpush1.bf16.msra.mxu0 0
  %799 = vmatprep.subr.bf16.mxu0 0
  %800 = vmatpush1.bf16.msra.mxu0 0
  %801 = vmatprep.mubr.bf16.mxu0 0
  %802 = vmatmul.mubr.bf16.gmra.mrb[0].mxu0 %v758
  %v803 = vpop.f32.mrb[0].mxu0
  %v804 = vadd.f32 %v743, %v803
  %v805 = vpop.f32.mrb[0].mxu0
  %v806 = vpop.f32.mrb[0].mxu0
  %v807 = vadd.f32 %v743, %v806
  %v808 = vpop.f32.mrb[0].mxu0
  %809 = vmatprep.mubr.bf16.mxu0 0
  %810 = vmatmul.mubr.bf16.gmra.mrb[0].mxu0 %v761
  %v811 = vpop.f32.mrb[0].mxu0
  %v812 = vadd.f32 %v743, %v811
  %v813 = vpop.f32.mrb[0].mxu0
  %v814 = vpop.f32.mrb[0].mxu0
  %v815 = vadd.f32 %v743, %v814
  %v816 = vpop.f32.mrb[0].mxu0
  %817 = vmatprep.mubr.bf16.mxu0 0
  %818 = vmatmul.mubr.bf16.gmra.mrb[0].mxu0 %v764
  %v819 = vpop.f32.mrb[0].mxu0
  %v820 = vadd.f32 %v743, %v819
  %v821 = vpop.f32.mrb[0].mxu0
  %v822 = vpop.f32.mrb[0].mxu0
  %v823 = vadd.f32 %v743, %v822
  %v824 = vpop.f32.mrb[0].mxu0
  %825 = vmatprep.mubr.bf16.mxu0 0
  %826 = vmatmul.mubr.bf16.gmra.mrb[0].mxu0 %v767
  %v827 = vpop.f32.mrb[0].mxu0
  %v828 = vadd.f32 %v743, %v827
  %v829 = vpop.f32.mrb[0].mxu0
  %v830 = vpop.f32.mrb[0].mxu0
  %v831 = vadd.f32 %v743, %v830
  %v832 = vpop.f32.mrb[0].mxu0
  %833 = vdwg.mxu0
  %v834 = vxor.u32 %v804, 2147483648
  %v835 = vmul.f32 %v834, 1.442695
  %v836 = vpow.pop %v835
  %v837 = vadd.f32 %v836, 1.0
  %v838 = vrcp.pop %v837
  %v839 = vmul.f32 1.0, %v838
  %v840 = vtanh.pop %v804
  %842 = vrot.lane.b32.xlu0 %v840, 32
  %v843 = vpop.permute.xlu0 %842
  %v845 = vmul.f32 %v839, %v843
  %v846 = vtanh.pop %v845
  %848 = vrot.lane.b32.xlu0 %v846, 64
  %v849 = vpop.permute.xlu0 %848
  %v851 = vmul.f32 %v839, %v849
  %v852 = vpack.c.bf16 %v851, %v851
  %854 = vrot.lane.b32.xlu0 %v852, 64
  %v855 = vpop.permute.xlu0 %854
  %v860 = vunpack.c.l.b16 %v730
  %v861 = vunpack.c.l.b16 %v731
  %v862 = vunpack.c.l.b16 %v732
  %v863 = vunpack.c.l.b16 %v733
  %v864 = vpack.c.b16 %v861, %v860
  %v865 = vpack.c.b16 %v863, %v862
  %v869 = vsel %vm192, %v855, 0
  %871 = vmatprep.subr.bf16.mxu0 0
  %872 = vmatpush1.bf16.msra.mxu0 %v864
  %873 = vmatprep.subr.bf16.mxu0 0
  %874 = vmatpush1.bf16.msra.mxu0 %v865
  %875 = vmatprep.subr.bf16.mxu0 0
  %876 = vmatpush1.bf16.msra.mxu0 0
  %877 = vmatprep.subr.bf16.mxu0 0
  %878 = vmatpush1.bf16.msra.mxu0 0
  %879 = vmatprep.subr.bf16.mxu0 0
  %880 = vmatpush1.bf16.msra.mxu0 0
  %881 = vmatprep.subr.bf16.mxu0 0
  %882 = vmatpush1.bf16.msra.mxu0 0
  %883 = vmatprep.subr.bf16.mxu0 0
  %884 = vmatpush1.bf16.msra.mxu0 0
  %885 = vmatprep.subr.bf16.mxu0 0
  %886 = vmatpush1.bf16.msra.mxu0 0
  %887 = vmatprep.subr.bf16.mxu0 0
  %888 = vmatpush1.bf16.msra.mxu0 0
  %889 = vmatprep.subr.bf16.mxu0 0
  %890 = vmatpush1.bf16.msra.mxu0 0
  %891 = vmatprep.subr.bf16.mxu0 0
  %892 = vmatpush1.bf16.msra.mxu0 0
  %893 = vmatprep.subr.bf16.mxu0 0
  %894 = vmatpush1.bf16.msra.mxu0 0
  %895 = vmatprep.subr.bf16.mxu0 0
  %896 = vmatpush1.bf16.msra.mxu0 0
  %897 = vmatprep.subr.bf16.mxu0 0
  %898 = vmatpush1.bf16.msra.mxu0 0
  %899 = vmatprep.subr.bf16.mxu0 0
  %900 = vmatpush1.bf16.msra.mxu0 0
  %901 = vmatprep.subr.bf16.mxu0 0
  %902 = vmatpush1.bf16.msra.mxu0 0
  %903 = vmatprep.mubr.bf16.mxu0 0
  %904 = vmatmul.mubr.bf16.gmra.mrb[0].mxu0 %v869
  %v905 = vpop.f32.mrb[0].mxu0
  %v906 = vadd.f32 0.0, %v905
  %v907 = vpop.f32.mrb[0].mxu0
  %v908 = vpop.f32.mrb[0].mxu0
  %v909 = vpop.f32.mrb[0].mxu0
  %910 = vdwg.mxu0
  %v911 = vadd.f32 %v807, %v906
  %v912 = vxor.u32 %v911, 2147483648
  %v913 = vmul.f32 %v912, 1.442695
  %v914 = vpow.pop %v913
  %v915 = vadd.f32 %v914, 1.0
  %v916 = vrcp.pop %v915
  %v917 = vmul.f32 1.0, %v916
  %v918 = vtanh.pop %v911
  %920 = vrot.lane.b32.xlu0 %v845, 32
  %v921 = vpop.permute.xlu0 %920
  %v923 = vmul.f32 %v917, %v921
  %925 = vrot.lane.b32.xlu0 %v918, 32
  %v926 = vpop.permute.xlu0 %925
  %v928 = vmul.f32 %v917, %v926
  %930 = vrot.lane.b32.xlu0 %v928, 32
  %v931 = vpop.permute.xlu0 %930
  %v933 = vadd.f32 %v923, %v931
  %v934 = vtanh.pop %v933
  %936 = vrot.lane.b32.xlu0 %v934, 32
  %v937 = vpop.permute.xlu0 %936
  %v939 = vmul.f32 %v917, %v937
  %v940 = vpack.c.bf16 %v939, %v939
  %942 = vrot.lane.b32.xlu0 %v940, 64
  %v943 = vpop.permute.xlu0 %942
  %v945 = vsel %vm192, %v943, 0
  %947 = vmatprep.subr.bf16.mxu0 0
  %948 = vmatpush1.bf16.msra.mxu0 %v864
  %949 = vmatprep.subr.bf16.mxu0 0
  %950 = vmatpush1.bf16.msra.mxu0 %v865
  %951 = vmatprep.subr.bf16.mxu0 0
  %952 = vmatpush1.bf16.msra.mxu0 0
  %953 = vmatprep.subr.bf16.mxu0 0
  %954 = vmatpush1.bf16.msra.mxu0 0
  %955 = vmatprep.subr.bf16.mxu0 0
  %956 = vmatpush1.bf16.msra.mxu0 0
  %957 = vmatprep.subr.bf16.mxu0 0
  %958 = vmatpush1.bf16.msra.mxu0 0
  %959 = vmatprep.subr.bf16.mxu0 0
  %960 = vmatpush1.bf16.msra.mxu0 0
  %961 = vmatprep.subr.bf16.mxu0 0
  %962 = vmatpush1.bf16.msra.mxu0 0
  %963 = vmatprep.subr.bf16.mxu0 0
  %964 = vmatpush1.bf16.msra.mxu0 0
  %965 = vmatprep.subr.bf16.mxu0 0
  %966 = vmatpush1.bf16.msra.mxu0 0
  %967 = vmatprep.subr.bf16.mxu0 0
  %968 = vmatpush1.bf16.msra.mxu0 0
  %969 = vmatprep.subr.bf16.mxu0 0
  %970 = vmatpush1.bf16.msra.mxu0 0
  %971 = vmatprep.subr.bf16.mxu0 0
  %972 = vmatpush1.bf16.msra.mxu0 0
  %973 = vmatprep.subr.bf16.mxu0 0
  %974 = vmatpush1.bf16.msra.mxu0 0
  %975 = vmatprep.subr.bf16.mxu0 0
  %976 = vmatpush1.bf16.msra.mxu0 0
  %977 = vmatprep.subr.bf16.mxu0 0
  %978 = vmatpush1.bf16.msra.mxu0 0
  %979 = vmatprep.mubr.bf16.mxu0 0
  %980 = vmatmul.mubr.bf16.gmra.mrb[0].mxu0 %v945
  %v981 = vpop.f32.mrb[0].mxu0
  %v982 = vadd.f32 0.0, %v981
  %v983 = vpop.f32.mrb[0].mxu0
  %v984 = vpop.f32.mrb[0].mxu0
  %v985 = vpop.f32.mrb[0].mxu0
  %986 = vdwg.mxu0
  %v987 = vadd.f32 %v812, %v982
  %v988 = vxor.u32 %v987, 2147483648
  %v989 = vmul.f32 %v988, 1.442695
  %v990 = vpow.pop %v989
  %v991 = vadd.f32 %v990, 1.0
  %v992 = vrcp.pop %v991
  %v993 = vmul.f32 1.0, %v992
  %v994 = vtanh.pop %v987
  %v995 = vmul.f32 %v993, %v933
  %997 = vrot.lane.b32.xlu0 %v994, 32
  %v998 = vpop.permute.xlu0 %997
  %v1000 = vmul.f32 %v993, %v998
  %1002 = vrot.lane.b32.xlu0 %v1000, 32
  %v1003 = vpop.permute.xlu0 %1002
  %v1005 = vadd.f32 %v995, %v1003
  %v1006 = vtanh.pop %v1005
  %1008 = vrot.lane.b32.xlu0 %v1006, 32
  %v1009 = vpop.permute.xlu0 %1008
  %v1011 = vmul.f32 %v993, %v1009
  %v1012 = vpack.c.bf16 %v1011, %v1011
  %1014 = vrot.lane.b32.xlu0 %v1012, 64
  %v1015 = vpop.permute.xlu0 %1014
  %v1017 = vsel %vm192, %v1015, 0
  %1019 = vmatprep.subr.bf16.mxu0 0
  %1020 = vmatpush1.bf16.msra.mxu0 %v864
  %1021 = vmatprep.subr.bf16.mxu0 0
  %1022 = vmatpush1.bf16.msra.mxu0 %v865
  %1023 = vmatprep.subr.bf16.mxu0 0
  %1024 = vmatpush1.bf16.msra.mxu0 0
  %1025 = vmatprep.subr.bf16.mxu0 0
  %1026 = vmatpush1.bf16.msra.mxu0 0
  %1027 = vmatprep.subr.bf16.mxu0 0
  %1028 = vmatpush1.bf16.msra.mxu0 0
  %1029 = vmatprep.subr.bf16.mxu0 0
  %1030 = vmatpush1.bf16.msra.mxu0 0
  %1031 = vmatprep.subr.bf16.mxu0 0
  %1032 = vmatpush1.bf16.msra.mxu0 0
  %1033 = vmatprep.subr.bf16.mxu0 0
  %1034 = vmatpush1.bf16.msra.mxu0 0
  %1035 = vmatprep.subr.bf16.mxu0 0
  %1036 = vmatpush1.bf16.msra.mxu0 0
  %1037 = vmatprep.subr.bf16.mxu0 0
  %1038 = vmatpush1.bf16.msra.mxu0 0
  %1039 = vmatprep.subr.bf16.mxu0 0
  %1040 = vmatpush1.bf16.msra.mxu0 0
  %1041 = vmatprep.subr.bf16.mxu0 0
  %1042 = vmatpush1.bf16.msra.mxu0 0
  %1043 = vmatprep.subr.bf16.mxu0 0
  %1044 = vmatpush1.bf16.msra.mxu0 0
  %1045 = vmatprep.subr.bf16.mxu0 0
  %1046 = vmatpush1.bf16.msra.mxu0 0
  %1047 = vmatprep.subr.bf16.mxu0 0
  %1048 = vmatpush1.bf16.msra.mxu0 0
  %1049 = vmatprep.subr.bf16.mxu0 0
  %1050 = vmatpush1.bf16.msra.mxu0 0
  %1051 = vmatprep.mubr.bf16.mxu0 0
  %1052 = vmatmul.mubr.bf16.gmra.mrb[0].mxu0 %v1017
  %v1053 = vpop.f32.mrb[0].mxu0
  %v1054 = vadd.f32 0.0, %v1053
  %v1055 = vpop.f32.mrb[0].mxu0
  %v1056 = vpop.f32.mrb[0].mxu0
  %v1057 = vpop.f32.mrb[0].mxu0
  %1058 = vdwg.mxu0
  %v1059 = vadd.f32 %v815, %v1054
  %v1060 = vxor.u32 %v1059, 2147483648
  %v1061 = vmul.f32 %v1060, 1.442695
  %v1062 = vpow.pop %v1061
  %v1063 = vadd.f32 %v1062, 1.0
  %v1064 = vrcp.pop %v1063
  %v1065 = vmul.f32 1.0, %v1064
  %v1066 = vtanh.pop %v1059
  %v1067 = vmul.f32 %v1065, %v1005
  %1069 = vrot.lane.b32.xlu0 %v1066, 32
  %v1070 = vpop.permute.xlu0 %1069
  %v1072 = vmul.f32 %v1065, %v1070
  %1074 = vrot.lane.b32.xlu0 %v1072, 32
  %v1075 = vpop.permute.xlu0 %1074
  %v1077 = vadd.f32 %v1067, %v1075
  %v1078 = vtanh.pop %v1077
  %1080 = vrot.lane.b32.xlu0 %v1078, 32
  %v1081 = vpop.permute.xlu0 %1080
  %v1083 = vmul.f32 %v1065, %v1081
  %v1084 = vpack.c.bf16 %v1083, %v1083
  %1086 = vrot.lane.b32.xlu0 %v1084, 64
  %v1087 = vpop.permute.xlu0 %1086
  %v1089 = vsel %vm192, %v1087, 0
  %1091 = vmatprep.subr.bf16.mxu0 0
  %1092 = vmatpush1.bf16.msra.mxu0 %v864
  %1093 = vmatprep.subr.bf16.mxu0 0
  %1094 = vmatpush1.bf16.msra.mxu0 %v865
  %1095 = vmatprep.subr.bf16.mxu0 0
  %1096 = vmatpush1.bf16.msra.mxu0 0
  %1097 = vmatprep.subr.bf16.mxu0 0
  %1098 = vmatpush1.bf16.msra.mxu0 0
  %1099 = vmatprep.subr.bf16.mxu0 0
  %1100 = vmatpush1.bf16.msra.mxu0 0
  %1101 = vmatprep.subr.bf16.mxu0 0
  %1102 = vmatpush1.bf16.msra.mxu0 0
  %1103 = vmatprep.subr.bf16.mxu0 0
  %1104 = vmatpush1.bf16.msra.mxu0 0
  %1105 = vmatprep.subr.bf16.mxu0 0
  %1106 = vmatpush1.bf16.msra.mxu0 0
  %1107 = vmatprep.subr.bf16.mxu0 0
  %1108 = vmatpush1.bf16.msra.mxu0 0
  %1109 = vmatprep.subr.bf16.mxu0 0
  %1110 = vmatpush1.bf16.msra.mxu0 0
  %1111 = vmatprep.subr.bf16.mxu0 0
  %1112 = vmatpush1.bf16.msra.mxu0 0
  %1113 = vmatprep.subr.bf16.mxu0 0
  %1114 = vmatpush1.bf16.msra.mxu0 0
  %1115 = vmatprep.subr.bf16.mxu0 0
  %1116 = vmatpush1.bf16.msra.mxu0 0
  %1117 = vmatprep.subr.bf16.mxu0 0
  %1118 = vmatpush1.bf16.msra.mxu0 0
  %1119 = vmatprep.subr.bf16.mxu0 0
  %1120 = vmatpush1.bf16.msra.mxu0 0
  %1121 = vmatprep.subr.bf16.mxu0 0
  %1122 = vmatpush1.bf16.msra.mxu0 0
  %1123 = vmatprep.mubr.bf16.mxu0 0
  %1124 = vmatmul.mubr.bf16.gmra.mrb[0].mxu0 %v1089
  %v1125 = vpop.f32.mrb[0].mxu0
  %v1126 = vadd.f32 0.0, %v1125
  %v1127 = vpop.f32.mrb[0].mxu0
  %v1128 = vpop.f32.mrb[0].mxu0
  %v1129 = vpop.f32.mrb[0].mxu0
  %1130 = vdwg.mxu0
  %v1131 = vadd.f32 %v820, %v1126
  %v1132 = vxor.u32 %v1131, 2147483648
  %v1133 = vmul.f32 %v1132, 1.442695
  %v1134 = vpow.pop %v1133
  %v1135 = vadd.f32 %v1134, 1.0
  %v1136 = vrcp.pop %v1135
  %v1137 = vmul.f32 1.0, %v1136
  %v1138 = vtanh.pop %v1131
  %v1139 = vmul.f32 %v1137, %v1077
  %1141 = vrot.lane.b32.xlu0 %v1138, 32
  %v1142 = vpop.permute.xlu0 %1141
  %v1144 = vmul.f32 %v1137, %v1142
  %1146 = vrot.lane.b32.xlu0 %v1144, 32
  %v1147 = vpop.permute.xlu0 %1146
  %v1149 = vadd.f32 %v1139, %v1147
  %v1150 = vtanh.pop %v1149
  %1152 = vrot.lane.b32.xlu0 %v1150, 32
  %v1153 = vpop.permute.xlu0 %1152
  %v1155 = vmul.f32 %v1137, %v1153
  %v1156 = vpack.c.bf16 %v1155, %v1155
  %1158 = vrot.lane.b32.xlu0 %v1156, 64
  %v1159 = vpop.permute.xlu0 %1158
  %v1161 = vsel %vm192, %v1159, 0
  %1163 = vmatprep.subr.bf16.mxu0 0
  %1164 = vmatpush1.bf16.msra.mxu0 %v864
  %1165 = vmatprep.subr.bf16.mxu0 0
  %1166 = vmatpush1.bf16.msra.mxu0 %v865
  %1167 = vmatprep.subr.bf16.mxu0 0
  %1168 = vmatpush1.bf16.msra.mxu0 0
  %1169 = vmatprep.subr.bf16.mxu0 0
  %1170 = vmatpush1.bf16.msra.mxu0 0
  %1171 = vmatprep.subr.bf16.mxu0 0
  %1172 = vmatpush1.bf16.msra.mxu0 0
  %1173 = vmatprep.subr.bf16.mxu0 0
  %1174 = vmatpush1.bf16.msra.mxu0 0
  %1175 = vmatprep.subr.bf16.mxu0 0
  %1176 = vmatpush1.bf16.msra.mxu0 0
  %1177 = vmatprep.subr.bf16.mxu0 0
  %1178 = vmatpush1.bf16.msra.mxu0 0
  %1179 = vmatprep.subr.bf16.mxu0 0
  %1180 = vmatpush1.bf16.msra.mxu0 0
  %1181 = vmatprep.subr.bf16.mxu0 0
  %1182 = vmatpush1.bf16.msra.mxu0 0
  %1183 = vmatprep.subr.bf16.mxu0 0
  %1184 = vmatpush1.bf16.msra.mxu0 0
  %1185 = vmatprep.subr.bf16.mxu0 0
  %1186 = vmatpush1.bf16.msra.mxu0 0
  %1187 = vmatprep.subr.bf16.mxu0 0
  %1188 = vmatpush1.bf16.msra.mxu0 0
  %1189 = vmatprep.subr.bf16.mxu0 0
  %1190 = vmatpush1.bf16.msra.mxu0 0
  %1191 = vmatprep.subr.bf16.mxu0 0
  %1192 = vmatpush1.bf16.msra.mxu0 0
  %1193 = vmatprep.subr.bf16.mxu0 0
  %1194 = vmatpush1.bf16.msra.mxu0 0
  %1195 = vmatprep.mubr.bf16.mxu0 0
  %1196 = vmatmul.mubr.bf16.gmra.mrb[0].mxu0 %v1161
  %v1197 = vpop.f32.mrb[0].mxu0
  %v1198 = vadd.f32 0.0, %v1197
  %v1199 = vpop.f32.mrb[0].mxu0
  %v1200 = vpop.f32.mrb[0].mxu0
  %v1201 = vpop.f32.mrb[0].mxu0
  %1202 = vdwg.mxu0
  %v1203 = vadd.f32 %v823, %v1198
  %v1204 = vxor.u32 %v1203, 2147483648
  %v1205 = vmul.f32 %v1204, 1.442695
  %v1206 = vpow.pop %v1205
  %v1207 = vadd.f32 %v1206, 1.0
  %v1208 = vrcp.pop %v1207
  %v1209 = vmul.f32 1.0, %v1208
  %v1210 = vtanh.pop %v1203
  %v1211 = vmul.f32 %v1209, %v1149
  %1213 = vrot.lane.b32.xlu0 %v1210, 32
  %v1214 = vpop.permute.xlu0 %1213
  %v1216 = vmul.f32 %v1209, %v1214
  %1218 = vrot.lane.b32.xlu0 %v1216, 32
  %v1219 = vpop.permute.xlu0 %1218
  %v1221 = vadd.f32 %v1211, %v1219
  %v1222 = vtanh.pop %v1221
  %1224 = vrot.lane.b32.xlu0 %v1222, 32
  %v1225 = vpop.permute.xlu0 %1224
  %v1227 = vmul.f32 %v1209, %v1225
  %v1228 = vpack.c.bf16 %v1227, %v1227
  %1230 = vrot.lane.b32.xlu0 %v1228, 64
  %v1231 = vpop.permute.xlu0 %1230
  %v1233 = vsel %vm192, %v1231, 0
  %1235 = vmatprep.subr.bf16.mxu0 0
  %1236 = vmatpush1.bf16.msra.mxu0 %v864
  %1237 = vmatprep.subr.bf16.mxu0 0
  %1238 = vmatpush1.bf16.msra.mxu0 %v865
  %1239 = vmatprep.subr.bf16.mxu0 0
  %1240 = vmatpush1.bf16.msra.mxu0 0
  %1241 = vmatprep.subr.bf16.mxu0 0
  %1242 = vmatpush1.bf16.msra.mxu0 0
  %1243 = vmatprep.subr.bf16.mxu0 0
  %1244 = vmatpush1.bf16.msra.mxu0 0
  %1245 = vmatprep.subr.bf16.mxu0 0
  %1246 = vmatpush1.bf16.msra.mxu0 0
  %1247 = vmatprep.subr.bf16.mxu0 0
  %1248 = vmatpush1.bf16.msra.mxu0 0
  %1249 = vmatprep.subr.bf16.mxu0 0
  %1250 = vmatpush1.bf16.msra.mxu0 0
  %1251 = vmatprep.subr.bf16.mxu0 0
  %1252 = vmatpush1.bf16.msra.mxu0 0
  %1253 = vmatprep.subr.bf16.mxu0 0
  %1254 = vmatpush1.bf16.msra.mxu0 0
  %1255 = vmatprep.subr.bf16.mxu0 0
  %1256 = vmatpush1.bf16.msra.mxu0 0
  %1257 = vmatprep.subr.bf16.mxu0 0
  %1258 = vmatpush1.bf16.msra.mxu0 0
  %1259 = vmatprep.subr.bf16.mxu0 0
  %1260 = vmatpush1.bf16.msra.mxu0 0
  %1261 = vmatprep.subr.bf16.mxu0 0
  %1262 = vmatpush1.bf16.msra.mxu0 0
  %1263 = vmatprep.subr.bf16.mxu0 0
  %1264 = vmatpush1.bf16.msra.mxu0 0
  %1265 = vmatprep.subr.bf16.mxu0 0
  %1266 = vmatpush1.bf16.msra.mxu0 0
  %1267 = vmatprep.mubr.bf16.mxu0 0
  %1268 = vmatmul.mubr.bf16.gmra.mrb[0].mxu0 %v1233
  %v1269 = vpop.f32.mrb[0].mxu0
  %v1270 = vadd.f32 0.0, %v1269
  %v1271 = vpop.f32.mrb[0].mxu0
  %v1272 = vpop.f32.mrb[0].mxu0
  %v1273 = vpop.f32.mrb[0].mxu0
  %1274 = vdwg.mxu0
  %v1275 = vadd.f32 %v828, %v1270
  %v1276 = vxor.u32 %v1275, 2147483648
  %v1277 = vmul.f32 %v1276, 1.442695
  %v1278 = vpow.pop %v1277
  %v1279 = vadd.f32 %v1278, 1.0
  %v1280 = vrcp.pop %v1279
  %v1281 = vmul.f32 1.0, %v1280
  %v1282 = vtanh.pop %v1275
  %v1283 = vmul.f32 %v1281, %v1221
  %1285 = vrot.lane.b32.xlu0 %v1282, 32
  %v1286 = vpop.permute.xlu0 %1285
  %v1288 = vmul.f32 %v1281, %v1286
  %1290 = vrot.lane.b32.xlu0 %v1288, 32
  %v1291 = vpop.permute.xlu0 %1290
  %v1293 = vadd.f32 %v1283, %v1291
  %v1294 = vtanh.pop %v1293
  %1296 = vrot.lane.b32.xlu0 %v1294, 32
  %v1297 = vpop.permute.xlu0 %1296
  %v1299 = vmul.f32 %v1281, %v1297
  %v1300 = vpack.c.bf16 %v1299, %v1299
  %1302 = vrot.lane.b32.xlu0 %v1300, 64
  %v1303 = vpop.permute.xlu0 %1302
  %v1305 = vsel %vm192, %v1303, 0
  %1307 = vmatprep.subr.bf16.mxu0 0
  %1308 = vmatpush1.bf16.msra.mxu0 %v864
  %1309 = vmatprep.subr.bf16.mxu0 0
  %1310 = vmatpush1.bf16.msra.mxu0 %v865
  %1311 = vmatprep.subr.bf16.mxu0 0
  %1312 = vmatpush1.bf16.msra.mxu0 0
  %1313 = vmatprep.subr.bf16.mxu0 0
  %1314 = vmatpush1.bf16.msra.mxu0 0
  %1315 = vmatprep.subr.bf16.mxu0 0
  %1316 = vmatpush1.bf16.msra.mxu0 0
  %1317 = vmatprep.subr.bf16.mxu0 0
  %1318 = vmatpush1.bf16.msra.mxu0 0
  %1319 = vmatprep.subr.bf16.mxu0 0
  %1320 = vmatpush1.bf16.msra.mxu0 0
  %1321 = vmatprep.subr.bf16.mxu0 0
  %1322 = vmatpush1.bf16.msra.mxu0 0
  %1323 = vmatprep.subr.bf16.mxu0 0
  %1324 = vmatpush1.bf16.msra.mxu0 0
  %1325 = vmatprep.subr.bf16.mxu0 0
  %1326 = vmatpush1.bf16.msra.mxu0 0
  %1327 = vmatprep.subr.bf16.mxu0 0
  %1328 = vmatpush1.bf16.msra.mxu0 0
  %1329 = vmatprep.subr.bf16.mxu0 0
  %1330 = vmatpush1.bf16.msra.mxu0 0
  %1331 = vmatprep.subr.bf16.mxu0 0
  %1332 = vmatpush1.bf16.msra.mxu0 0
  %1333 = vmatprep.subr.bf16.mxu0 0
  %1334 = vmatpush1.bf16.msra.mxu0 0
  %1335 = vmatprep.subr.bf16.mxu0 0
  %1336 = vmatpush1.bf16.msra.mxu0 0
  %1337 = vmatprep.subr.bf16.mxu0 0
  %1338 = vmatpush1.bf16.msra.mxu0 0
  %1339 = vmatprep.mubr.bf16.mxu0 0
  %1340 = vmatmul.mubr.bf16.gmra.mrb[0].mxu0 %v1305
  %v1341 = vpop.f32.mrb[0].mxu0
  %v1342 = vadd.f32 0.0, %v1341
  %v1343 = vpop.f32.mrb[0].mxu0
  %v1344 = vpop.f32.mrb[0].mxu0
  %v1345 = vpop.f32.mrb[0].mxu0
  %1346 = vdwg.mxu0
  %v1347 = vadd.f32 %v831, %v1342
  %v1348 = vxor.u32 %v1347, 2147483648
  %v1349 = vmul.f32 %v1348, 1.442695
  %v1350 = vpow.pop %v1349
  %v1351 = vadd.f32 %v1350, 1.0
  %v1352 = vrcp.pop %v1351
  %v1353 = vmul.f32 1.0, %v1352
  %v1354 = vtanh.pop %v1347
  %v1355 = vmul.f32 %v1353, %v1293
  %1357 = vrot.lane.b32.xlu0 %v1354, 32
  %v1358 = vpop.permute.xlu0 %1357
  %v1360 = vmul.f32 %v1353, %v1358
  %1362 = vrot.lane.b32.xlu0 %v1360, 32
  %v1363 = vpop.permute.xlu0 %1362
  %v1365 = vadd.f32 %v1355, %v1363
  %v1366 = vtanh.pop %v1365
  %1368 = vrot.lane.b32.xlu0 %v1366, 32
  %v1369 = vpop.permute.xlu0 %1368
  %v1371 = vmul.f32 %v1353, %v1369
  %v1372 = vpack.c.bf16 %v1371, %v1371
  %v1373 = vld [vmem:[%s7] sm:$0xf]
  %v1374 = vld [vmem:[%s7 + $0x4] sm:$0xf]
  %v1375 = vld [vmem:[%s7 + $0x8] sm:$0xf]
  %v1376 = vld [vmem:[%s7 + $0xc] sm:$0xf]
  %v1377 = vld [vmem:[%s8] sm:$0x1]
  %v1379 = vlaneseq
  %v1380 = vshrl.u32 %v1379, 7
  %v1381 = vsub.s32 0, %v1380
  %v1382 = vrot.slane %v1377, %v1381
  %1385 = vrot.lane.b32.xlu0 %v1372, 64
  %v1386 = vpop.permute.xlu0 %1385
  %v1391 = vunpack.c.l.b16 %v1373
  %v1392 = vunpack.c.l.b16 %v1374
  %v1393 = vunpack.c.l.b16 %v1375
  %v1394 = vunpack.c.l.b16 %v1376
  %v1395 = vpack.c.b16 %v1392, %v1391
  %v1396 = vpack.c.b16 %v1394, %v1393
  %v1400 = vsel %vm192, %v1386, 0
  %1402 = vmatprep.subr.bf16.mxu0 0
  %1403 = vmatpush1.bf16.msra.mxu0 %v1395
  %1404 = vmatprep.subr.bf16.mxu0 0
  %1405 = vmatpush1.bf16.msra.mxu0 %v1396
  %1406 = vmatprep.subr.bf16.mxu0 0
  %1407 = vmatpush1.bf16.msra.mxu0 0
  %1408 = vmatprep.subr.bf16.mxu0 0
  %1409 = vmatpush1.bf16.msra.mxu0 0
  %1410 = vmatprep.subr.bf16.mxu0 0
  %1411 = vmatpush1.bf16.msra.mxu0 0
  %1412 = vmatprep.subr.bf16.mxu0 0
  %1413 = vmatpush1.bf16.msra.mxu0 0
  %1414 = vmatprep.subr.bf16.mxu0 0
  %1415 = vmatpush1.bf16.msra.mxu0 0
  %1416 = vmatprep.subr.bf16.mxu0 0
  %1417 = vmatpush1.bf16.msra.mxu0 0
  %1418 = vmatprep.subr.bf16.mxu0 0
  %1419 = vmatpush1.bf16.msra.mxu0 0
  %1420 = vmatprep.subr.bf16.mxu0 0
  %1421 = vmatpush1.bf16.msra.mxu0 0
  %1422 = vmatprep.subr.bf16.mxu0 0
  %1423 = vmatpush1.bf16.msra.mxu0 0
  %1424 = vmatprep.subr.bf16.mxu0 0
  %1425 = vmatpush1.bf16.msra.mxu0 0
  %1426 = vmatprep.subr.bf16.mxu0 0
  %1427 = vmatpush1.bf16.msra.mxu0 0
  %1428 = vmatprep.subr.bf16.mxu0 0
  %1429 = vmatpush1.bf16.msra.mxu0 0
  %1430 = vmatprep.subr.bf16.mxu0 0
  %1431 = vmatpush1.bf16.msra.mxu0 0
  %1432 = vmatprep.subr.bf16.mxu0 0
  %1433 = vmatpush1.bf16.msra.mxu0 0
  %1434 = vmatprep.mubr.bf16.mxu0 0
  %1435 = vmatmul.mubr.bf16.gmra.mrb[0].mxu0 %v1400
  %v1436 = vpop.f32.mrb[0].mxu0
  %v1437 = vadd.f32 %v1382, %v1436
  %v1438 = vpop.f32.mrb[0].mxu0
  %v1439 = vpop.f32.mrb[0].mxu0
  %v1440 = vpop.f32.mrb[0].mxu0
  %1441 = vdwg.mxu0
  %vm1442 = vcmask 23552
  %1443 = vst.msk [vmem:[%s9] sm:$0xff] %vm1442, %v1437
  // Predicated region
  $region38: #{tpu_custom_call.1} parent=0 // pred_check
    _
  $region39: #{tpu_custom_call.1} parent=0 // pred_check_branch
    %1445 = sbr.rel (0) target = $region41
  $region40: #{tpu_custom_call.1} parent=0 // pred_region
    _
  $region41: #{tpu_custom_call.1} parent=0 // pred_fallthru
    _
  // Predicated region
  $region42: #{tpu_custom_call.1} parent=0 // pred_check
    _
  $region43: #{tpu_custom_call.1} parent=0 // pred_check_branch
    %1447 = sbr.rel (0) target = $region45
  $region44: #{tpu_custom_call.1} parent=0 // pred_region
    _
  $region45: #{tpu_custom_call.1} parent=0 // pred_fallthru
    _

</llo_original>
